<compile_context>
chip_gen: v7x
topology: tpu7x:2x2x1
jax: 0.10.0
libtpu: 0.0.40
codegen_flags: <defaults>
</compile_context>

<pallas_src>
import functools

import jax
import jax.numpy as jnp
from jax.experimental import pallas as pl
from jax.experimental.pallas import tpu as pltpu


# ----------------------------------------------------------------------------
# VGG16 `features` architecture (torchvision layer indices 0..30)
# ----------------------------------------------------------------------------
VGG16_FEATURES_CFG = [
    ("conv", 3, 64), ("relu",), ("conv", 64, 64), ("relu",), ("pool",),
    ("conv", 64, 128), ("relu",), ("conv", 128, 128), ("relu",), ("pool",),
    ("conv", 128, 256), ("relu",), ("conv", 256, 256), ("relu",),
    ("conv", 256, 256), ("relu",), ("pool",),
    ("conv", 256, 512), ("relu",), ("conv", 512, 512), ("relu",),
    ("conv", 512, 512), ("relu",), ("pool",),
    ("conv", 512, 512), ("relu",), ("conv", 512, 512), ("relu",),
    ("conv", 512, 512), ("relu",), ("pool",),
]

_COMPUTE_DTYPE = jnp.bfloat16  # storage/matmul dtype; accumulation & epilogue stay f32


def _pick_row_tile(h, cap=64):
    """Largest divisor of h that is <= cap (whole image if it already fits)."""
    if h <= cap:
        return h
    for t in range(cap, 0, -1):
        if h % t == 0:
            return t
    return h


# ----------------------------------------------------------------------------
# Pallas kernels
# ----------------------------------------------------------------------------
def _fused_conv3x3_kernel(x_ref, w_ref, b_ref, o_ref, *, TH, W, apply_relu):
    """3x3 conv (stride 1, pad 1) + bias (+ ReLU) on one padded/haloed row tile.

    x_ref: (1, 1, TH+2, W+2, Cin)  bf16 NHWC row tile (halo rows included)
    w_ref: (3, 3, Cin, Cout)       bf16 HWIO weights (resident across the grid)
    b_ref: (1, Cout)               f32 bias
    o_ref: (1, 1, TH*W, Cout)      flattened-spatial output tile
    """
    cin = x_ref.shape[-1]
    cout = o_ref.shape[-1]
    x = x_ref[0, 0]                                        # (TH+2, W+2, Cin)
    acc = jnp.zeros((TH * W, cout), jnp.float32)
    # 3 W-shifted views (sublane shifts) instead of 9; dh selection is free.
    for dw in range(3):
        xw = x[:, dw:dw + W, :]                            # (TH+2, W, Cin)
        for dh in range(3):
            tap = xw[dh:dh + TH].reshape(TH * W, cin)      # bf16
            acc += jnp.dot(tap, w_ref[dh, dw],
                           preferred_element_type=jnp.float32)
    acc = acc + b_ref[...]                                 # f32 bias, broadcasts over rows
    if apply_relu:
        acc = jnp.maximum(acc, 0.0)                        # f32 epilogue (v5e-friendly)
    o_ref[0, 0] = acc.astype(o_ref.dtype)


def _relu_kernel(x_ref, o_ref):
    # Only used when a pre-ReLU conv activation was explicitly requested.
    o_ref[...] = jnp.maximum(x_ref[...], 0).astype(o_ref.dtype)


def _maxpool2x2_kernel(x_ref, o_ref):
    """MaxPool 2x2 stride 2.

    x_ref: (1, H/2, 2, W/2, 2, C)  (wrapper pre-reshapes so no strided access needed)
    o_ref: (1, H/2, W/2, C)
    """
    a = x_ref[0, :, 0, :, 0, :]
    b = x_ref[0, :, 0, :, 1, :]
    c = x_ref[0, :, 1, :, 0, :]
    d = x_ref[0, :, 1, :, 1, :]
    o_ref[0] = jnp.maximum(jnp.maximum(a, b), jnp.maximum(c, d))


# ----------------------------------------------------------------------------
# Layer wrappers (glue: halo tiles / reshape / pallas_call setup)
# ----------------------------------------------------------------------------
def conv3x3(x_nhwc, w_hwio, bias, *, apply_relu):
    """Fused 3x3 conv + bias (+ ReLU).  x, w are bf16; bias f32; output bf16."""
    N, H, W, Cin = x_nhwc.shape
    Cout = w_hwio.shape[-1]
    TH = _pick_row_tile(H)
    R = H // TH

    xp = jnp.pad(x_nhwc, ((0, 0), (1, 1), (1, 1), (0, 0)))
    # Overlapping row tiles (2 halo rows each): a single wrapper copy that replaces the
    # old pad-only copy and keeps every grid block small & plain-Blocked indexable.
    x_tiles = jnp.stack([xp[:, r * TH:r * TH + TH + 2] for r in range(R)], axis=1)

    out = pl.pallas_call(
        functools.partial(_fused_conv3x3_kernel, TH=TH, W=W, apply_relu=apply_relu),
        out_shape=jax.ShapeDtypeStruct((N, R, TH * W, Cout), x_nhwc.dtype),
        grid=(N, R),
        in_specs=[
            pl.BlockSpec((1, 1, TH + 2, W + 2, Cin), lambda n, r: (n, r, 0, 0, 0)),
            pl.BlockSpec((3, 3, Cin, Cout), lambda n, r: (0, 0, 0, 0)),
            pl.BlockSpec((1, Cout), lambda n, r: (0, 0)),
        ],
        out_specs=pl.BlockSpec((1, 1, TH * W, Cout), lambda n, r: (n, r, 0, 0)),
        compiler_params=pltpu.CompilerParams(
            dimension_semantics=("parallel", "parallel")),
    )(x_tiles, w_hwio, bias.reshape(1, Cout).astype(jnp.float32))
    return out.reshape(N, H, W, Cout)


def relu(x_nhwc):
    N, H, W, C = x_nhwc.shape
    return pl.pallas_call(
        _relu_kernel,
        out_shape=jax.ShapeDtypeStruct(x_nhwc.shape, x_nhwc.dtype),
        grid=(N,),
        in_specs=[pl.BlockSpec((1, H, W, C), lambda n: (n, 0, 0, 0))],
        out_specs=pl.BlockSpec((1, H, W, C), lambda n: (n, 0, 0, 0)),
        compiler_params=pltpu.CompilerParams(dimension_semantics=("parallel",)),
    )(x_nhwc)


def maxpool2x2(x_nhwc):
    N, H, W, C = x_nhwc.shape
    Hh, Wh = H // 2, W // 2
    xr = x_nhwc.reshape(N, Hh, 2, Wh, 2, C)
    return pl.pallas_call(
        _maxpool2x2_kernel,
        out_shape=jax.ShapeDtypeStruct((N, Hh, Wh, C), x_nhwc.dtype),
        grid=(N,),
        in_specs=[pl.BlockSpec((1, Hh, 2, Wh, 2, C),
                               lambda n: (n, 0, 0, 0, 0, 0))],
        out_specs=pl.BlockSpec((1, Hh, Wh, C), lambda n: (n, 0, 0, 0)),
        compiler_params=pltpu.CompilerParams(dimension_semantics=("parallel",)),
    )(xr)


def _to_nchw_f32(x_nhwc):
    return jnp.transpose(x_nhwc, (0, 3, 1, 2)).astype(jnp.float32)


# ----------------------------------------------------------------------------
# The module
# ----------------------------------------------------------------------------
class NetVGGFeatures:
    """Pallas port of the PyTorch NetVGGFeatures module."""

    def __init__(self, layer_ids, key=None):
        if key is None:
            key = jax.random.PRNGKey(0)
        self.layer_ids = tuple(layer_ids)
        self.params = {}
        n_layers = self.layer_ids[-1] + 1
        for i in range(n_layers):
            cfg = VGG16_FEATURES_CFG[i]
            if cfg[0] == "conv":
                _, cin, cout = cfg
                key, kw, kb = jax.random.split(key, 3)
                w = (jax.random.normal(kw, (3, 3, cin, cout), jnp.float32) * 0.05
                     ).astype(_COMPUTE_DTYPE)                 # HWIO, bf16 for the MXU
                b = jax.random.normal(kb, (cout,), jnp.float32) * 0.05
                self.params[i] = (w, b)

    def __call__(self, x_nchw):
        # NCHW (PyTorch) -> NHWC bf16 (kernel layout / storage dtype)
        x = jnp.transpose(x_nchw, (0, 2, 3, 1)).astype(_COMPUTE_DTYPE)
        outputs = []
        last = self.layer_ids[-1]
        i = 0
        while i <= last:
            cfg = VGG16_FEATURES_CFG[i]
            if cfg[0] == "conv":
                w, b = self.params[i]
                # In VGG16, a ReLU always directly follows a conv; fuse it unless the
                # pre-ReLU activation itself is requested or lies beyond `last`.
                fuse = (i not in self.layer_ids) and (i + 1 <= last)
                x = conv3x3(x, w, b, apply_relu=fuse)
                if fuse:
                    if i + 1 in self.layer_ids:
                        outputs.append(_to_nchw_f32(x))
                    i += 2
                else:
                    if i in self.layer_ids:
                        outputs.append(_to_nchw_f32(x))
                    i += 1
            elif cfg[0] == "relu":
                x = relu(x)
                if i in self.layer_ids:
                    outputs.append(_to_nchw_f32(x))
                i += 1
            else:  # pool
                x = maxpool2x2(x)
                if i in self.layer_ids:
                    outputs.append(_to_nchw_f32(x))
                i += 1
        return outputs


# ----------------------------------------------------------------------------
# Pure-JAX reference with the same dtype policy (for correctness check only)
# ----------------------------------------------------------------------------
def vgg_features_ref(x_nchw, net):
    x = jnp.transpose(x_nchw, (0, 2, 3, 1)).astype(_COMPUTE_DTYPE)
    outs = []
    for i in range(net.layer_ids[-1] + 1):
        cfg = VGG16_FEATURES_CFG[i]
        if cfg[0] == "conv":
            w, b = net.params[i]
            y = jax.lax.conv_general_dilated(
                x, w, window_strides=(1, 1), padding="SAME",
                dimension_numbers=("NHWC", "HWIO", "NHWC"),
                preferred_element_type=jnp.float32) + b
            x = y.astype(_COMPUTE_DTYPE)
        elif cfg[0] == "relu":
            x = jnp.maximum(x, 0).astype(_COMPUTE_DTYPE)
        else:
            x = jax.lax.reduce_window(
                x.astype(jnp.float32), -jnp.inf, jax.lax.max,
                window_dimensions=(1, 2, 2, 1),
                window_strides=(1, 2, 2, 1), padding="VALID").astype(_COMPUTE_DTYPE)
        if i in net.layer_ids:
            outs.append(jnp.transpose(x, (0, 3, 1, 2)).astype(jnp.float32))
    return outs


# ----------------------------------------------------------------------------
if __name__ == "__main__":
    key = jax.random.PRNGKey(0)
    k_in, k_params = jax.random.split(key)

    # Small shapes consistent with the module: VGG expects 3 input channels.
    x = jax.random.normal(k_in, (2, 3, 16, 16), jnp.float32)  # NCHW

    # Exercises: fused conv+relu (layers 0/1, 2/3, 5/6), standalone pool (4),
    # unfused conv (pre-ReLU output requested at 7) and the standalone relu path (8).
    layer_ids = (1, 4, 7, 8)
    net = NetVGGFeatures(layer_ids, key=k_params)

    outs = jax.block_until_ready(net(x))

    refs = vgg_features_ref(x, net)
    assert len(outs) == len(refs)
    for o, r in zip(outs, refs):
        assert o.shape == r.shape, (o.shape, r.shape)
        # Tolerance covers occasional 1-ulp bf16 flips from differing f32 summation order.
        assert jnp.allclose(o, r, atol=2e-2, rtol=2e-2), "mismatch vs reference"

    print("KERNEL_OK")
</pallas_src>

<mosaic_0001>
module attributes {stable_mosaic.version = 11 : i64} {
  func.func @_fused_conv3x3_kernel(%arg0: i32, %arg1: i32, %arg2: memref<1x1x18x18x3xbf16, #tpu.memory_space<vmem>>, %arg3: memref<3x3x3x64xbf16, #tpu.memory_space<vmem>>, %arg4: memref<1x64xf32, #tpu.memory_space<vmem>>, %arg5: memref<1x1x256x64xbf16, #tpu.memory_space<vmem>>) attributes {dimension_semantics = [#tpu.dimension_semantics<parallel>, #tpu.dimension_semantics<parallel>], iteration_bounds = array<i64: 2, 1>, scalar_prefetch = 0 : i64, scratch_operands = 0 : i64, tpu.core_type = #tpu.core_type<tc>, window_params = [{transform_indices = @transform_0, window_bounds = array<i64: 1, 1, 18, 18, 3>}, {pipeline_mode = #tpu.pipeline_mode<synchronous>, transform_indices = @transform_1, window_bounds = array<i64: 3, 3, 3, 64>}, {pipeline_mode = #tpu.pipeline_mode<synchronous>, transform_indices = @transform_2, window_bounds = array<i64: 1, 64>}, {transform_indices = @transform_3, window_bounds = array<i64: 1, 1, 256, 64>}]} {
    %c0 = arith.constant 0 : index
    %c0_0 = arith.constant 0 : index
    %c0_1 = arith.constant 0 : index
    %c0_2 = arith.constant 0 : index
    %c0_3 = arith.constant 0 : index
    %0 = vector.load %arg2[%c0, %c0_0, %c0_1, %c0_2, %c0_3] : memref<1x1x18x18x3xbf16, #tpu.memory_space<vmem>>, vector<1x1x18x18x3xbf16>
    %1 = vector.shape_cast %0 : vector<1x1x18x18x3xbf16> to vector<18x18x3xbf16>
    %cst = arith.constant 0.000000e+00 : f32
    %2 = vector.broadcast %cst : f32 to vector<256x64xf32>
    %3 = vector.extract_strided_slice %1 {offsets = [0, 0, 0], sizes = [18, 16, 3], strides = [1, 1, 1]} : vector<18x18x3xbf16> to vector<18x16x3xbf16>
    %4 = vector.extract_strided_slice %3 {offsets = [0, 0, 0], sizes = [16, 16, 3], strides = [1, 1, 1]} : vector<18x16x3xbf16> to vector<16x16x3xbf16>
    %5 = vector.shape_cast %4 : vector<16x16x3xbf16> to vector<256x3xbf16>
    %c0_4 = arith.constant 0 : index
    %c0_5 = arith.constant 0 : index
    %c0_6 = arith.constant 0 : index
    %c0_7 = arith.constant 0 : index
    %6 = vector.load %arg3[%c0_4, %c0_5, %c0_6, %c0_7] : memref<3x3x3x64xbf16, #tpu.memory_space<vmem>>, vector<1x1x3x64xbf16>
    %7 = vector.shape_cast %6 : vector<1x1x3x64xbf16> to vector<3x64xbf16>
    %cst_8 = arith.constant dense<0.000000e+00> : vector<256x64xf32>
    %8 = tpu.matmul %5, %7, %cst_8 {dimension_numbers = #tpu.dot_dimension_numbers<[1], [0], [0], [1], [0, 0, 1, 1], [], []>} : vector<256x3xbf16>, vector<3x64xbf16>, vector<256x64xf32> -> vector<256x64xf32>
    %9 = arith.addf %2, %8 : vector<256x64xf32>
    %10 = vector.extract_strided_slice %3 {offsets = [1, 0, 0], sizes = [16, 16, 3], strides = [1, 1, 1]} : vector<18x16x3xbf16> to vector<16x16x3xbf16>
    %11 = vector.shape_cast %10 : vector<16x16x3xbf16> to vector<256x3xbf16>
    %c1 = arith.constant 1 : index
    %c0_9 = arith.constant 0 : index
    %c0_10 = arith.constant 0 : index
    %c0_11 = arith.constant 0 : index
    %12 = vector.load %arg3[%c1, %c0_9, %c0_10, %c0_11] : memref<3x3x3x64xbf16, #tpu.memory_space<vmem>>, vector<1x1x3x64xbf16>
    %13 = vector.shape_cast %12 : vector<1x1x3x64xbf16> to vector<3x64xbf16>
    %cst_12 = arith.constant dense<0.000000e+00> : vector<256x64xf32>
    %14 = tpu.matmul %11, %13, %cst_12 {dimension_numbers = #tpu.dot_dimension_numbers<[1], [0], [0], [1], [0, 0, 1, 1], [], []>} : vector<256x3xbf16>, vector<3x64xbf16>, vector<256x64xf32> -> vector<256x64xf32>
    %15 = arith.addf %9, %14 : vector<256x64xf32>
    %16 = vector.extract_strided_slice %3 {offsets = [2, 0, 0], sizes = [16, 16, 3], strides = [1, 1, 1]} : vector<18x16x3xbf16> to vector<16x16x3xbf16>
    %17 = vector.shape_cast %16 : vector<16x16x3xbf16> to vector<256x3xbf16>
    %c2 = arith.constant 2 : index
    %c0_13 = arith.constant 0 : index
    %c0_14 = arith.constant 0 : index
    %c0_15 = arith.constant 0 : index
    %18 = vector.load %arg3[%c2, %c0_13, %c0_14, %c0_15] : memref<3x3x3x64xbf16, #tpu.memory_space<vmem>>, vector<1x1x3x64xbf16>
    %19 = vector.shape_cast %18 : vector<1x1x3x64xbf16> to vector<3x64xbf16>
    %cst_16 = arith.constant dense<0.000000e+00> : vector<256x64xf32>
    %20 = tpu.matmul %17, %19, %cst_16 {dimension_numbers = #tpu.dot_dimension_numbers<[1], [0], [0], [1], [0, 0, 1, 1], [], []>} : vector<256x3xbf16>, vector<3x64xbf16>, vector<256x64xf32> -> vector<256x64xf32>
    %21 = arith.addf %15, %20 : vector<256x64xf32>
    %22 = vector.extract_strided_slice %1 {offsets = [0, 1, 0], sizes = [18, 16, 3], strides = [1, 1, 1]} : vector<18x18x3xbf16> to vector<18x16x3xbf16>
    %23 = vector.extract_strided_slice %22 {offsets = [0, 0, 0], sizes = [16, 16, 3], strides = [1, 1, 1]} : vector<18x16x3xbf16> to vector<16x16x3xbf16>
    %24 = vector.shape_cast %23 : vector<16x16x3xbf16> to vector<256x3xbf16>
    %c0_17 = arith.constant 0 : index
    %c1_18 = arith.constant 1 : index
    %c0_19 = arith.constant 0 : index
    %c0_20 = arith.constant 0 : index
    %25 = vector.load %arg3[%c0_17, %c1_18, %c0_19, %c0_20] : memref<3x3x3x64xbf16, #tpu.memory_space<vmem>>, vector<1x1x3x64xbf16>
    %26 = vector.shape_cast %25 : vector<1x1x3x64xbf16> to vector<3x64xbf16>
    %cst_21 = arith.constant dense<0.000000e+00> : vector<256x64xf32>
    %27 = tpu.matmul %24, %26, %cst_21 {dimension_numbers = #tpu.dot_dimension_numbers<[1], [0], [0], [1], [0, 0, 1, 1], [], []>} : vector<256x3xbf16>, vector<3x64xbf16>, vector<256x64xf32> -> vector<256x64xf32>
    %28 = arith.addf %21, %27 : vector<256x64xf32>
    %29 = vector.extract_strided_slice %22 {offsets = [1, 0, 0], sizes = [16, 16, 3], strides = [1, 1, 1]} : vector<18x16x3xbf16> to vector<16x16x3xbf16>
    %30 = vector.shape_cast %29 : vector<16x16x3xbf16> to vector<256x3xbf16>
    %c1_22 = arith.constant 1 : index
    %c1_23 = arith.constant 1 : index
    %c0_24 = arith.constant 0 : index
    %c0_25 = arith.constant 0 : index
    %31 = vector.load %arg3[%c1_22, %c1_23, %c0_24, %c0_25] : memref<3x3x3x64xbf16, #tpu.memory_space<vmem>>, vector<1x1x3x64xbf16>
    %32 = vector.shape_cast %31 : vector<1x1x3x64xbf16> to vector<3x64xbf16>
    %cst_26 = arith.constant dense<0.000000e+00> : vector<256x64xf32>
    %33 = tpu.matmul %30, %32, %cst_26 {dimension_numbers = #tpu.dot_dimension_numbers<[1], [0], [0], [1], [0, 0, 1, 1], [], []>} : vector<256x3xbf16>, vector<3x64xbf16>, vector<256x64xf32> -> vector<256x64xf32>
    %34 = arith.addf %28, %33 : vector<256x64xf32>
    %35 = vector.extract_strided_slice %22 {offsets = [2, 0, 0], sizes = [16, 16, 3], strides = [1, 1, 1]} : vector<18x16x3xbf16> to vector<16x16x3xbf16>
    %36 = vector.shape_cast %35 : vector<16x16x3xbf16> to vector<256x3xbf16>
    %c2_27 = arith.constant 2 : index
    %c1_28 = arith.constant 1 : index
    %c0_29 = arith.constant 0 : index
    %c0_30 = arith.constant 0 : index
    %37 = vector.load %arg3[%c2_27, %c1_28, %c0_29, %c0_30] : memref<3x3x3x64xbf16, #tpu.memory_space<vmem>>, vector<1x1x3x64xbf16>
    %38 = vector.shape_cast %37 : vector<1x1x3x64xbf16> to vector<3x64xbf16>
    %cst_31 = arith.constant dense<0.000000e+00> : vector<256x64xf32>
    %39 = tpu.matmul %36, %38, %cst_31 {dimension_numbers = #tpu.dot_dimension_numbers<[1], [0], [0], [1], [0, 0, 1, 1], [], []>} : vector<256x3xbf16>, vector<3x64xbf16>, vector<256x64xf32> -> vector<256x64xf32>
    %40 = arith.addf %34, %39 : vector<256x64xf32>
    %41 = vector.extract_strided_slice %1 {offsets = [0, 2, 0], sizes = [18, 16, 3], strides = [1, 1, 1]} : vector<18x18x3xbf16> to vector<18x16x3xbf16>
    %42 = vector.extract_strided_slice %41 {offsets = [0, 0, 0], sizes = [16, 16, 3], strides = [1, 1, 1]} : vector<18x16x3xbf16> to vector<16x16x3xbf16>
    %43 = vector.shape_cast %42 : vector<16x16x3xbf16> to vector<256x3xbf16>
    %c0_32 = arith.constant 0 : index
    %c2_33 = arith.constant 2 : index
    %c0_34 = arith.constant 0 : index
    %c0_35 = arith.constant 0 : index
    %44 = vector.load %arg3[%c0_32, %c2_33, %c0_34, %c0_35] : memref<3x3x3x64xbf16, #tpu.memory_space<vmem>>, vector<1x1x3x64xbf16>
    %45 = vector.shape_cast %44 : vector<1x1x3x64xbf16> to vector<3x64xbf16>
    %cst_36 = arith.constant dense<0.000000e+00> : vector<256x64xf32>
    %46 = tpu.matmul %43, %45, %cst_36 {dimension_numbers = #tpu.dot_dimension_numbers<[1], [0], [0], [1], [0, 0, 1, 1], [], []>} : vector<256x3xbf16>, vector<3x64xbf16>, vector<256x64xf32> -> vector<256x64xf32>
    %47 = arith.addf %40, %46 : vector<256x64xf32>
    %48 = vector.extract_strided_slice %41 {offsets = [1, 0, 0], sizes = [16, 16, 3], strides = [1, 1, 1]} : vector<18x16x3xbf16> to vector<16x16x3xbf16>
    %49 = vector.shape_cast %48 : vector<16x16x3xbf16> to vector<256x3xbf16>
    %c1_37 = arith.constant 1 : index
    %c2_38 = arith.constant 2 : index
    %c0_39 = arith.constant 0 : index
    %c0_40 = arith.constant 0 : index
    %50 = vector.load %arg3[%c1_37, %c2_38, %c0_39, %c0_40] : memref<3x3x3x64xbf16, #tpu.memory_space<vmem>>, vector<1x1x3x64xbf16>
    %51 = vector.shape_cast %50 : vector<1x1x3x64xbf16> to vector<3x64xbf16>
    %cst_41 = arith.constant dense<0.000000e+00> : vector<256x64xf32>
    %52 = tpu.matmul %49, %51, %cst_41 {dimension_numbers = #tpu.dot_dimension_numbers<[1], [0], [0], [1], [0, 0, 1, 1], [], []>} : vector<256x3xbf16>, vector<3x64xbf16>, vector<256x64xf32> -> vector<256x64xf32>
    %53 = arith.addf %47, %52 : vector<256x64xf32>
    %54 = vector.extract_strided_slice %41 {offsets = [2, 0, 0], sizes = [16, 16, 3], strides = [1, 1, 1]} : vector<18x16x3xbf16> to vector<16x16x3xbf16>
    %55 = vector.shape_cast %54 : vector<16x16x3xbf16> to vector<256x3xbf16>
    %c2_42 = arith.constant 2 : index
    %c2_43 = arith.constant 2 : index
    %c0_44 = arith.constant 0 : index
    %c0_45 = arith.constant 0 : index
    %56 = vector.load %arg3[%c2_42, %c2_43, %c0_44, %c0_45] : memref<3x3x3x64xbf16, #tpu.memory_space<vmem>>, vector<1x1x3x64xbf16>
    %57 = vector.shape_cast %56 : vector<1x1x3x64xbf16> to vector<3x64xbf16>
    %cst_46 = arith.constant dense<0.000000e+00> : vector<256x64xf32>
    %58 = tpu.matmul %55, %57, %cst_46 {dimension_numbers = #tpu.dot_dimension_numbers<[1], [0], [0], [1], [0, 0, 1, 1], [], []>} : vector<256x3xbf16>, vector<3x64xbf16>, vector<256x64xf32> -> vector<256x64xf32>
    %59 = arith.addf %53, %58 : vector<256x64xf32>
    %c0_47 = arith.constant 0 : index
    %c0_48 = arith.constant 0 : index
    %60 = vector.load %arg4[%c0_47, %c0_48] : memref<1x64xf32, #tpu.memory_space<vmem>>, vector<1x64xf32>
    %61 = vector.broadcast %60 : vector<1x64xf32> to vector<256x64xf32>
    %62 = arith.addf %59, %61 : vector<256x64xf32>
    %cst_49 = arith.constant 0.000000e+00 : f32
    %63 = vector.broadcast %cst_49 : f32 to vector<256x64xf32>
    %64 = arith.maximumf %62, %63 : vector<256x64xf32>
    %65 = arith.truncf %64 : vector<256x64xf32> to vector<256x64xbf16>
    %c0_50 = arith.constant 0 : index
    %c0_51 = arith.constant 0 : index
    %c0_52 = arith.constant 0 : index
    %c0_53 = arith.constant 0 : index
    %66 = vector.load %arg5[%c0_50, %c0_51, %c0_52, %c0_53] : memref<1x1x256x64xbf16, #tpu.memory_space<vmem>>, vector<1x1x256x64xbf16>
    %67 = vector.shape_cast %66 : vector<1x1x256x64xbf16> to vector<256x64xbf16>
    %68 = vector.shape_cast %65 : vector<256x64xbf16> to vector<1x1x256x64xbf16>
    tpu.vector_store %arg5[%c0_50, %c0_51, %c0_52, %c0_53], %68 {strides = array<i32>} : memref<1x1x256x64xbf16, #tpu.memory_space<vmem>>, vector<1x1x256x64xbf16>,
    return
  }
  func.func @transform_0(%arg0: i32, %arg1: i32) -> (i32, i32, i32, i32, i32) {
    %c0_i32 = arith.constant 0 : i32
    %c0_i32_0 = arith.constant 0 : i32
    %c0_i32_1 = arith.constant 0 : i32
    %c0_i32_2 = arith.constant 0 : i32
    return %arg0, %arg1, %c0_i32, %c0_i32_0, %c0_i32_1 : i32, i32, i32, i32, i32
  }
  func.func @transform_1(%arg0: i32, %arg1: i32) -> (i32, i32, i32, i32) {
    %c0_i32 = arith.constant 0 : i32
    %c0_i32_0 = arith.constant 0 : i32
    %c0_i32_1 = arith.constant 0 : i32
    %c0_i32_2 = arith.constant 0 : i32
    %c0_i32_3 = arith.constant 0 : i32
    return %c0_i32, %c0_i32_0, %c0_i32_1, %c0_i32_2 : i32, i32, i32, i32
  }
  func.func @transform_2(%arg0: i32, %arg1: i32) -> (i32, i32) {
    %c0_i32 = arith.constant 0 : i32
    %c0_i32_0 = arith.constant 0 : i32
    %c0_i32_1 = arith.constant 0 : i32
    return %c0_i32, %c0_i32_0 : i32, i32
  }
  func.func @transform_3(%arg0: i32, %arg1: i32) -> (i32, i32, i32, i32) {
    %c0_i32 = arith.constant 0 : i32
    %c0_i32_0 = arith.constant 0 : i32
    %c0_i32_1 = arith.constant 0 : i32
    return %arg0, %arg1, %c0_i32, %c0_i32_0 : i32, i32, i32, i32
  }
}

</mosaic_0001>

<llo_original>
// kernel: tpu_custom_call.1
$region0: #{tpu_custom_call.1}
  #allocation0 [shape = 'u32[]', space=smem, size = 0x4, offset = 0x4, fixed_abs, tag = 'smem constant byte address 0x4 - core index']
  #allocation1 [shape = 'u32[144,128]{1,0:T(1,128)}', space=vmem, size = 0x12000, scoped, tag = 'internal scratch']
  %s0 = inlined_call_operand.vmem [shape: bf16[2,1,18,18,3], index: 0, kind: input, shape index: {}]
  %s1 = inlined_call_operand.vmem [shape: bf16[3,3,3,64], index: 1, kind: input, shape index: {}]
  %s2 = inlined_call_operand.vmem [shape: f32[1,64], index: 2, kind: input, shape index: {}]
  %s3 = inlined_call_operand.vmem [shape: bf16[2,1,256,64], index: 3, kind: output, shape index: {}]
  %s4 = sld [smem:[#allocation0]]
  $region45: #{tpu_custom_call.1} parent=0
    _
  %s6 = ssub.s32 1, %s4
  %s7 = scalar_select 0, %s6, %s4
  loop: start=0, step=1, limit=4
  $region2: #{tpu_custom_call.1} parent=0 // loop_pre_header
    _
  $region3: #{tpu_custom_call.1} parent=0 // loop_header
    %s9 = sphi 0, %s13
    %p10 = scmp.ge.s32.totalorder %s9, 4
    %s16 = sphi 0, %s28
    %s17 = sphi 0, %s24
    %s18 = sphi 0, %s16
    %s19 = sphi 0, %s17
    %s20 = sphi 0, %s18
    %s21 = sphi 0, %s19
    %s33 = sphi 0, %s35
    %s36 = sphi 0, %s33
    %s37 = sphi 0, %s36
    %s53 = sphi 0, %s37
    %s57 = sphi 0, %s57
    %s59 = sphi 0, %s57
    %s60 = sphi 0, %s59
    %s74 = sphi 0, %s60
    %s78 = sphi 0, %s78
    %s80 = sphi 0, %s78
    %s81 = sphi 0, %s80
    %s95 = sphi 0, %s81
    %s103 = sphi 0, %s105
    %s106 = sphi 0, %s103
    %s107 = sphi 0, %s106
    %s123 = sphi 0, %s107
  $region4: #{tpu_custom_call.1} parent=0 // loop_header_branch
    %12 = sbr.rel (%p10) target = $region8
  $region5: #{tpu_custom_call.1} parent=0 // loop_body
    %s14 = ssub.s32 %s9, 1
    %s15 = ssub.s32 %s9, 2
    %s22 = sadd.s32 1, %s17
    %p23 = scmp.ge.s32.totalorder %s22, 1
    %s24 = scalar_select %p23, 0, %s22
    %s25 = sadd.s32 1, %s16
    %s26 = scalar_select %p23, %s25, %s16
    %p27 = scmp.ge.s32.totalorder %s26, 2
    %s28 = scalar_select %p27, 0, %s26
    %s29 = ssub.s32 %s16, %s28
    %s30 = ssub.s32 %s17, %s24
    %s31 = sor.u32 %s29, %s30
    %p32 = scmp.eq.s32.totalorder %s31, 0
    %s34 = sadd.s32 %s33, 1
    %s35 = scalar_select %p32, %s33, %s34
    %p38 = pneg %p32
    %p39 = scmp.eq.s32.totalorder %s9, 1
    %p40 = por %p38, %p39
    %p41 = scmp.ne.s32.totalorder %s33, %s36
    %p42 = scmp.eq.s32.totalorder %s9, 0
    %p43 = por %p41, %p42
    %p44 = scmp.ne.s32.totalorder %s33, %s36
    %p45 = scmp.eq.s32.totalorder %s14, 1
    %p46 = por %p44, %p45
    %p47 = scmp.ne.s32.totalorder %s36, %s37
    %p48 = scmp.eq.s32.totalorder %s14, 0
    %p49 = por %p47, %p48
    %p50 = scmp.ne.s32.totalorder %s36, %s37
    %p51 = scmp.eq.s32.totalorder %s15, 1
    %p52 = por %p50, %p51
    %p54 = scmp.ne.s32.totalorder %s37, %s53
    %p55 = scmp.eq.s32.totalorder %s15, 0
    %p56 = por %p54, %p55
    %s58 = sadd.s32 %s57, 1
    %p61 = scmp.eq.s32.totalorder %s9, 1
    %p62 = scmp.ne.s32.totalorder %s57, %s59
    %p63 = scmp.eq.s32.totalorder %s9, 0
    %p64 = por %p62, %p63
    %p65 = scmp.ne.s32.totalorder %s57, %s59
    %p66 = scmp.eq.s32.totalorder %s14, 1
    %p67 = por %p65, %p66
    %p68 = scmp.ne.s32.totalorder %s59, %s60
    %p69 = scmp.eq.s32.totalorder %s14, 0
    %p70 = por %p68, %p69
    %p71 = scmp.ne.s32.totalorder %s59, %s60
    %p72 = scmp.eq.s32.totalorder %s15, 1
    %p73 = por %p71, %p72
    %p75 = scmp.ne.s32.totalorder %s60, %s74
    %p76 = scmp.eq.s32.totalorder %s15, 0
    %p77 = por %p75, %p76
    %s79 = sadd.s32 %s78, 1
    %p82 = scmp.eq.s32.totalorder %s9, 1
    %p83 = scmp.ne.s32.totalorder %s78, %s80
    %p84 = scmp.eq.s32.totalorder %s9, 0
    %p85 = por %p83, %p84
    %p86 = scmp.ne.s32.totalorder %s78, %s80
    %p87 = scmp.eq.s32.totalorder %s14, 1
    %p88 = por %p86, %p87
    %p89 = scmp.ne.s32.totalorder %s80, %s81
    %p90 = scmp.eq.s32.totalorder %s14, 0
    %p91 = por %p89, %p90
    %p92 = scmp.ne.s32.totalorder %s80, %s81
    %p93 = scmp.eq.s32.totalorder %s15, 1
    %p94 = por %p92, %p93
    %p96 = scmp.ne.s32.totalorder %s81, %s95
    %p97 = scmp.eq.s32.totalorder %s15, 0
    %p98 = por %p96, %p97
    %s99 = ssub.s32 %s16, %s28
    %s100 = ssub.s32 %s17, %s24
    %s101 = sor.u32 %s99, %s100
    %p102 = scmp.eq.s32.totalorder %s101, 0
    %s104 = sadd.s32 %s103, 1
    %s105 = scalar_select %p102, %s103, %s104
    %p108 = pneg %p102
    %p109 = scmp.eq.s32.totalorder %s9, 1
    %p110 = por %p108, %p109
    %p111 = scmp.ne.s32.totalorder %s103, %s106
    %p112 = scmp.eq.s32.totalorder %s9, 0
    %p113 = por %p111, %p112
    %p114 = scmp.ne.s32.totalorder %s103, %s106
    %p115 = scmp.eq.s32.totalorder %s14, 1
    %p116 = por %p114, %p115
    %p117 = scmp.ne.s32.totalorder %s106, %s107
    %p118 = scmp.eq.s32.totalorder %s14, 0
    %p119 = por %p117, %p118
    %p120 = scmp.ne.s32.totalorder %s106, %s107
    %p121 = scmp.eq.s32.totalorder %s15, 1
    %p122 = por %p120, %p121
    %p124 = scmp.ne.s32.totalorder %s107, %s123
    %p125 = scmp.eq.s32.totalorder %s15, 0
    %p126 = por %p124, %p125
    %p127 = scmp.le.s32.totalorder 1, %s9
    %p128 = scmp.lt.s32.totalorder %s9, 3
    %p129 = pnand %p127, %p128
    %p130 = pneg %p129
    // Predicated region
    $region9: #{tpu_custom_call.1} parent=5 // pred_check
      _
    $region10: #{tpu_custom_call.1} parent=5 // pred_check_branch
      %132 = sbr.rel (%p129) target = $region12
    $region11: #{tpu_custom_call.1} parent=5 // pred_region
      %s133 = ssub.s32 %s9, 1
      // Predicated region
      $region13: #{tpu_custom_call.1} parent=11 // pred_check
        %p134 = pneg %p70
      $region14: #{tpu_custom_call.1} parent=11 // pred_check_branch
        %136 = sbr.rel (%p134) target = $region16
      $region15: #{tpu_custom_call.1} parent=11 // pred_region
        _
      $region16: #{tpu_custom_call.1} parent=11 // pred_fallthru
        _
      // Predicated region
      $region17: #{tpu_custom_call.1} parent=11 // pred_check
        %p137 = pneg %p91
      $region18: #{tpu_custom_call.1} parent=11 // pred_check_branch
        %139 = sbr.rel (%p137) target = $region20
      $region19: #{tpu_custom_call.1} parent=11 // pred_region
        _
      $region20: #{tpu_custom_call.1} parent=11 // pred_fallthru
        _
    $region12: #{tpu_custom_call.1} parent=5 // pred_fallthru
      _
    %p140 = scmp.lt.s32.totalorder %s9, 2
    // Predicated region
    $region21: #{tpu_custom_call.1} parent=5 // pred_check
      %p141 = pneg %p140
    $region22: #{tpu_custom_call.1} parent=5 // pred_check_branch
      %143 = sbr.rel (%p141) target = $region24
    $region23: #{tpu_custom_call.1} parent=5 // pred_region
      // Predicated region
      $region25: #{tpu_custom_call.1} parent=23 // pred_check
        %p144 = pneg %p43
      $region26: #{tpu_custom_call.1} parent=23 // pred_check_branch
        %146 = sbr.rel (%p144) target = $region28
      $region27: #{tpu_custom_call.1} parent=23 // pred_region
        %p147 = scmp.lt.s32.totalorder %s16, 1
        %s148 = scalar_select %p147, %s16, 1
        %p149 = scmp.lt.s32.totalorder %s17, 0
        %s150 = scalar_select %p149, %s17, 0
        %s151 = smul.addr %s150, 54
        %s152 = smul.addr %s148, 54
        %s153 = sadd.s32 %s151, %s152
        %s154 = smul.addr %s153, 4
        %s155 = scalar_lea.vmem %s0, %s154
      $region28: #{tpu_custom_call.1} parent=23 // pred_fallthru
        _
    $region24: #{tpu_custom_call.1} parent=5 // pred_fallthru
      _
    %p156 = scmp.le.s32.totalorder 1, %s9
    %p157 = scmp.lt.s32.totalorder %s9, 3
    %p158 = pnand %p156, %p157
    %p159 = pneg %p158
    // Predicated region
    $region29: #{tpu_custom_call.1} parent=5 // pred_check
      _
    $region30: #{tpu_custom_call.1} parent=5 // pred_check_branch
      %161 = sbr.rel (%p158) target = $region32
    $region31: #{tpu_custom_call.1} parent=5 // pred_region
      %s162 = ssub.s32 %s9, 1
      %p163 = scmp.lt.s32.totalorder %s18, 1
      %s164 = scalar_select %p163, %s18, 1
      %p165 = scmp.lt.s32.totalorder %s19, 0
      %s166 = scalar_select %p165, %s19, 0
      %s167 = smul.addr %s166, 54
      %s168 = smul.addr %s164, 54
      %s169 = sadd.s32 %s167, %s168
      %s170 = smul.addr %s169, 4
      %s171 = scalar_lea.vmem %s0, %s170
      %p172 = pneg %p49
      %p173 = pneg %p46
      %p174 = pneg %p70
      %p175 = pneg %p67
      %p176 = pneg %p91
      %p177 = pneg %p88
      %p178 = pneg %p119
      %p179 = pneg %p116
      %p180 = scmp.lt.s32.totalorder %s18, 1
      %s181 = scalar_select %p180, %s18, 1
      %p182 = scmp.lt.s32.totalorder %s19, 0
      %s183 = scalar_select %p182, %s19, 0
      %s184 = smul.addr %s183, 32
      %s185 = smul.addr %s181, 32
      %s186 = sadd.s32 %s184, %s185
      %s187 = smul.addr %s186, 4
      %s188 = scalar_lea.vmem %s3, %s187
      %p189 = scmp.lt.s32.totalorder %s18, 1
      %s190 = scalar_select %p189, %s18, 1
      %p191 = scmp.lt.s32.totalorder %s19, 0
      %s192 = scalar_select %p191, %s19, 0
      %s193 = smul.addr %s192, 54
      %s194 = smul.addr %s190, 54
      %s195 = sadd.s32 %s193, %s194
      %s196 = smul.addr %s195, 4
      %s197 = scalar_lea.vmem %s0, %s196
      %p198 = scmp.lt.s32.totalorder %s18, 1
      %s199 = scalar_select %p198, %s18, 1
      %p200 = scmp.lt.s32.totalorder %s19, 0
      %s201 = scalar_select %p200, %s19, 0
      %s202 = smul.addr %s201, 32
      %s203 = smul.addr %s199, 32
      %s204 = sadd.s32 %s202, %s203
      %s205 = smul.addr %s204, 4
      %s206 = scalar_lea.vmem %s3, %s205
      %v208 = vld [vmem:[%s197] sm:$0xf]
      %v209 = vld [vmem:[%s197 + $0x4] sm:$0xf]
      %v210 = vld [vmem:[%s197 + $0x8] sm:$0x1]
      %v211 = vld [vmem:[%s197 + $0xc] sm:$0xf]
      %v212 = vld [vmem:[%s197 + $0x10] sm:$0xf]
      %v213 = vld [vmem:[%s197 + $0x14] sm:$0x1]
      %v214 = vld [vmem:[%s197 + $0x18] sm:$0xf]
      %v215 = vld [vmem:[%s197 + $0x1c] sm:$0xf]
      %v216 = vld [vmem:[%s197 + $0x20] sm:$0x1]
      %v217 = vld [vmem:[%s197 + $0x24] sm:$0xf]
      %v218 = vld [vmem:[%s197 + $0x28] sm:$0xf]
      %v219 = vld [vmem:[%s197 + $0x2c] sm:$0x1]
      %v220 = vld [vmem:[%s197 + $0x30] sm:$0xf]
      %v221 = vld [vmem:[%s197 + $0x34] sm:$0xf]
      %v222 = vld [vmem:[%s197 + $0x38] sm:$0x1]
      %v223 = vld [vmem:[%s197 + $0x3c] sm:$0xf]
      %v224 = vld [vmem:[%s197 + $0x40] sm:$0xf]
      %v225 = vld [vmem:[%s197 + $0x44] sm:$0x1]
      %v226 = vld [vmem:[%s197 + $0x48] sm:$0xf]
      %v227 = vld [vmem:[%s197 + $0x4c] sm:$0xf]
      %v228 = vld [vmem:[%s197 + $0x50] sm:$0x1]
      %v229 = vld [vmem:[%s197 + $0x54] sm:$0xf]
      %v230 = vld [vmem:[%s197 + $0x58] sm:$0xf]
      %v231 = vld [vmem:[%s197 + $0x5c] sm:$0x1]
      %v232 = vld [vmem:[%s197 + $0x60] sm:$0xf]
      %v233 = vld [vmem:[%s197 + $0x64] sm:$0xf]
      %v234 = vld [vmem:[%s197 + $0x68] sm:$0x1]
      %v235 = vld [vmem:[%s197 + $0x6c] sm:$0xf]
      %v236 = vld [vmem:[%s197 + $0x70] sm:$0xf]
      %v237 = vld [vmem:[%s197 + $0x74] sm:$0x1]
      %v238 = vld [vmem:[%s197 + $0x78] sm:$0xf]
      %v239 = vld [vmem:[%s197 + $0x7c] sm:$0xf]
      %v240 = vld [vmem:[%s197 + $0x80] sm:$0x1]
      %v241 = vld [vmem:[%s197 + $0x84] sm:$0xf]
      %v242 = vld [vmem:[%s197 + $0x88] sm:$0xf]
      %v243 = vld [vmem:[%s197 + $0x8c] sm:$0x1]
      %v244 = vld [vmem:[%s197 + $0x90] sm:$0xf]
      %v245 = vld [vmem:[%s197 + $0x94] sm:$0xf]
      %v246 = vld [vmem:[%s197 + $0x98] sm:$0x1]
      %v247 = vld [vmem:[%s197 + $0x9c] sm:$0xf]
      %v248 = vld [vmem:[%s197 + $0xa0] sm:$0xf]
      %v249 = vld [vmem:[%s197 + $0xa4] sm:$0x1]
      %v250 = vld [vmem:[%s197 + $0xa8] sm:$0xf]
      %v251 = vld [vmem:[%s197 + $0xac] sm:$0xf]
      %v252 = vld [vmem:[%s197 + $0xb0] sm:$0x1]
      %v253 = vld [vmem:[%s197 + $0xb4] sm:$0xf]
      %v254 = vld [vmem:[%s197 + $0xb8] sm:$0xf]
      %v255 = vld [vmem:[%s197 + $0xbc] sm:$0x1]
      %v256 = vld [vmem:[%s197 + $0xc0] sm:$0xf]
      %v257 = vld [vmem:[%s197 + $0xc4] sm:$0xf]
      %v258 = vld [vmem:[%s197 + $0xc8] sm:$0x1]
      %v259 = vld [vmem:[%s197 + $0xcc] sm:$0xf]
      %v260 = vld [vmem:[%s197 + $0xd0] sm:$0xf]
      %v261 = vld [vmem:[%s197 + $0xd4] sm:$0x1]
      %v262 = vld [vmem:[%s1] sm:$0x3]
      %s263 = scalar_lea.vmem %s1, 6
      %v264 = vld [vmem:[%s263] sm:$0x3]
      %v297 = vunpack.c.l.b16 %v211
      %v298 = vunpack.c.l.b16 %v212
      %v299 = vunpack.c.l.b16 %v214
      %v300 = vunpack.c.l.b16 %v215
      %v301 = vunpack.c.l.b16 %v217
      %v302 = vunpack.c.l.b16 %v218
      %v303 = vunpack.c.l.b16 %v220
      %v304 = vunpack.c.l.b16 %v221
      %v305 = vunpack.c.l.b16 %v223
      %v306 = vunpack.c.l.b16 %v224
      %v307 = vunpack.c.l.b16 %v226
      %v308 = vunpack.c.l.b16 %v227
      %v309 = vunpack.c.l.b16 %v229
      %v310 = vunpack.c.l.b16 %v230
      %v311 = vunpack.c.l.b16 %v232
      %v312 = vunpack.c.l.b16 %v233
      %v313 = vunpack.c.l.b16 %v235
      %v314 = vunpack.c.l.b16 %v236
      %v315 = vunpack.c.l.b16 %v238
      %v316 = vunpack.c.l.b16 %v239
      %v317 = vunpack.c.l.b16 %v241
      %v318 = vunpack.c.l.b16 %v242
      %v319 = vunpack.c.l.b16 %v244
      %v320 = vunpack.c.l.b16 %v245
      %v321 = vunpack.c.l.b16 %v247
      %v322 = vunpack.c.l.b16 %v248
      %v323 = vunpack.c.l.b16 %v250
      %v324 = vunpack.c.l.b16 %v251
      %v325 = vunpack.c.l.b16 %v253
      %v326 = vunpack.c.l.b16 %v254
      %v327 = vunpack.c.l.b16 %v256
      %v328 = vunpack.c.l.b16 %v257
      %v329 = vpack.c.b16 %v298, %v297
      %v330 = vpack.c.b16 %v300, %v299
      %v331 = vpack.c.b16 %v302, %v301
      %v332 = vpack.c.b16 %v304, %v303
      %v333 = vpack.c.b16 %v306, %v305
      %v334 = vpack.c.b16 %v308, %v307
      %v335 = vpack.c.b16 %v310, %v309
      %v336 = vpack.c.b16 %v312, %v311
      %v337 = vpack.c.b16 %v314, %v313
      %v338 = vpack.c.b16 %v316, %v315
      %v339 = vpack.c.b16 %v318, %v317
      %v340 = vpack.c.b16 %v320, %v319
      %v341 = vpack.c.b16 %v322, %v321
      %v342 = vpack.c.b16 %v324, %v323
      %v343 = vpack.c.b16 %v326, %v325
      %v344 = vpack.c.b16 %v328, %v327
      %vm345 = vcmask 23552
      %v347 = vsel %vm345, %v329, 0
      %v350 = vsel %vm345, %v330, 0
      %v353 = vsel %vm345, %v331, 0
      %v356 = vsel %vm345, %v332, 0
      %v359 = vsel %vm345, %v333, 0
      %v362 = vsel %vm345, %v334, 0
      %v365 = vsel %vm345, %v335, 0
      %v368 = vsel %vm345, %v336, 0
      %v371 = vsel %vm345, %v337, 0
      %v374 = vsel %vm345, %v338, 0
      %v377 = vsel %vm345, %v339, 0
      %v380 = vsel %vm345, %v340, 0
      %v383 = vsel %vm345, %v341, 0
      %v386 = vsel %vm345, %v342, 0
      %v389 = vsel %vm345, %v343, 0
      %v392 = vsel %vm345, %v344, 0
      %vm394 = vcmask 1040384
      %vm395 = vcmask 1041408
      %v396 = vsel %vm394, 4294967295, 65535
      %v397 = vsel %vm395, %v396, 0
      %v399 = vand.u32 %v264, %v397
      %401 = vmatprep.subr.bf16.mxu0 0
      %402 = vmatpush1.bf16.msra.mxu0 %v399
      %403 = vmatprep.subr.bf16.mxu0 0
      %404 = vmatpush1.bf16.msra.mxu0 0
      %405 = vmatprep.subr.bf16.mxu0 0
      %406 = vmatpush1.bf16.msra.mxu0 0
      %407 = vmatprep.subr.bf16.mxu0 0
      %408 = vmatpush1.bf16.msra.mxu0 0
      %409 = vmatprep.subr.bf16.mxu0 0
      %410 = vmatpush1.bf16.msra.mxu0 0
      %411 = vmatprep.subr.bf16.mxu0 0
      %412 = vmatpush1.bf16.msra.mxu0 0
      %413 = vmatprep.subr.bf16.mxu0 0
      %414 = vmatpush1.bf16.msra.mxu0 0
      %415 = vmatprep.subr.bf16.mxu0 0
      %416 = vmatpush1.bf16.msra.mxu0 0
      %417 = vmatprep.subr.bf16.mxu0 0
      %418 = vmatpush1.bf16.msra.mxu0 0
      %419 = vmatprep.subr.bf16.mxu0 0
      %420 = vmatpush1.bf16.msra.mxu0 0
      %421 = vmatprep.subr.bf16.mxu0 0
      %422 = vmatpush1.bf16.msra.mxu0 0
      %423 = vmatprep.subr.bf16.mxu0 0
      %424 = vmatpush1.bf16.msra.mxu0 0
      %425 = vmatprep.subr.bf16.mxu0 0
      %426 = vmatpush1.bf16.msra.mxu0 0
      %427 = vmatprep.subr.bf16.mxu0 0
      %428 = vmatpush1.bf16.msra.mxu0 0
      %429 = vmatprep.subr.bf16.mxu0 0
      %430 = vmatpush1.bf16.msra.mxu0 0
      %431 = vmatprep.subr.bf16.mxu0 0
      %432 = vmatpush1.bf16.msra.mxu0 0
      %433 = vmatprep.mubr.bf16.mxu0 0
      %434 = vmatmul.mubr.bf16.gmra.mrb[0].mxu0 %v347
      %v435 = vpop.f32.mrb[0].mxu0
      %v436 = vadd.f32 0.0, %v435
      %v437 = vpop.f32.mrb[0].mxu0
      %v438 = vpop.f32.mrb[0].mxu0
      %v439 = vadd.f32 0.0, %v438
      %v440 = vpop.f32.mrb[0].mxu0
      %441 = vmatprep.mubr.bf16.mxu0 0
      %442 = vmatmul.mubr.bf16.gmra.mrb[0].mxu0 %v350
      %v443 = vpop.f32.mrb[0].mxu0
      %v444 = vadd.f32 0.0, %v443
      %v445 = vpop.f32.mrb[0].mxu0
      %v446 = vpop.f32.mrb[0].mxu0
      %v447 = vadd.f32 0.0, %v446
      %v448 = vpop.f32.mrb[0].mxu0
      %449 = vmatprep.mubr.bf16.mxu0 0
      %450 = vmatmul.mubr.bf16.gmra.mrb[0].mxu0 %v353
      %v451 = vpop.f32.mrb[0].mxu0
      %v452 = vadd.f32 0.0, %v451
      %v453 = vpop.f32.mrb[0].mxu0
      %v454 = vpop.f32.mrb[0].mxu0
      %v455 = vadd.f32 0.0, %v454
      %v456 = vpop.f32.mrb[0].mxu0
      %457 = vmatprep.mubr.bf16.mxu0 0
      %458 = vmatmul.mubr.bf16.gmra.mrb[0].mxu0 %v356
      %v459 = vpop.f32.mrb[0].mxu0
      %v460 = vadd.f32 0.0, %v459
      %v461 = vpop.f32.mrb[0].mxu0
      %v462 = vpop.f32.mrb[0].mxu0
      %v463 = vadd.f32 0.0, %v462
      %v464 = vpop.f32.mrb[0].mxu0
      %465 = vmatprep.mubr.bf16.mxu0 0
      %466 = vmatmul.mubr.bf16.gmra.mrb[0].mxu0 %v359
      %v467 = vpop.f32.mrb[0].mxu0
      %v468 = vadd.f32 0.0, %v467
      %v469 = vpop.f32.mrb[0].mxu0
      %v470 = vpop.f32.mrb[0].mxu0
      %v471 = vadd.f32 0.0, %v470
      %v472 = vpop.f32.mrb[0].mxu0
      %473 = vmatprep.mubr.bf16.mxu0 0
      %474 = vmatmul.mubr.bf16.gmra.mrb[0].mxu0 %v362
      %v475 = vpop.f32.mrb[0].mxu0
      %v476 = vadd.f32 0.0, %v475
      %v477 = vpop.f32.mrb[0].mxu0
      %v478 = vpop.f32.mrb[0].mxu0
      %v479 = vadd.f32 0.0, %v478
      %v480 = vpop.f32.mrb[0].mxu0
      %481 = vmatprep.mubr.bf16.mxu0 0
      %482 = vmatmul.mubr.bf16.gmra.mrb[0].mxu0 %v365
      %v483 = vpop.f32.mrb[0].mxu0
      %v484 = vadd.f32 0.0, %v483
      %v485 = vpop.f32.mrb[0].mxu0
      %v486 = vpop.f32.mrb[0].mxu0
      %v487 = vadd.f32 0.0, %v486
      %v488 = vpop.f32.mrb[0].mxu0
      %489 = vmatprep.mubr.bf16.mxu0 0
      %490 = vmatmul.mubr.bf16.gmra.mrb[0].mxu0 %v368
      %v491 = vpop.f32.mrb[0].mxu0
      %v492 = vadd.f32 0.0, %v491
      %v493 = vpop.f32.mrb[0].mxu0
      %v494 = vpop.f32.mrb[0].mxu0
      %v495 = vadd.f32 0.0, %v494
      %v496 = vpop.f32.mrb[0].mxu0
      %497 = vmatprep.mubr.bf16.mxu0 0
      %498 = vmatmul.mubr.bf16.gmra.mrb[0].mxu0 %v371
      %v499 = vpop.f32.mrb[0].mxu0
      %v500 = vadd.f32 0.0, %v499
      %v501 = vpop.f32.mrb[0].mxu0
      %v502 = vpop.f32.mrb[0].mxu0
      %v503 = vadd.f32 0.0, %v502
      %v504 = vpop.f32.mrb[0].mxu0
      %505 = vmatprep.mubr.bf16.mxu0 0
      %506 = vmatmul.mubr.bf16.gmra.mrb[0].mxu0 %v374
      %v507 = vpop.f32.mrb[0].mxu0
      %v508 = vadd.f32 0.0, %v507
      %v509 = vpop.f32.mrb[0].mxu0
      %v510 = vpop.f32.mrb[0].mxu0
      %v511 = vadd.f32 0.0, %v510
      %v512 = vpop.f32.mrb[0].mxu0
      %513 = vmatprep.mubr.bf16.mxu0 0
      %514 = vmatmul.mubr.bf16.gmra.mrb[0].mxu0 %v377
      %v515 = vpop.f32.mrb[0].mxu0
      %v516 = vadd.f32 0.0, %v515
      %v517 = vpop.f32.mrb[0].mxu0
      %v518 = vpop.f32.mrb[0].mxu0
      %v519 = vadd.f32 0.0, %v518
      %v520 = vpop.f32.mrb[0].mxu0
      %521 = vmatprep.mubr.bf16.mxu0 0
      %522 = vmatmul.mubr.bf16.gmra.mrb[0].mxu0 %v380
      %v523 = vpop.f32.mrb[0].mxu0
      %v524 = vadd.f32 0.0, %v523
      %v525 = vpop.f32.mrb[0].mxu0
      %v526 = vpop.f32.mrb[0].mxu0
      %v527 = vadd.f32 0.0, %v526
      %v528 = vpop.f32.mrb[0].mxu0
      %529 = vmatprep.mubr.bf16.mxu0 0
      %530 = vmatmul.mubr.bf16.gmra.mrb[0].mxu0 %v383
      %v531 = vpop.f32.mrb[0].mxu0
      %v532 = vadd.f32 0.0, %v531
      %v533 = vpop.f32.mrb[0].mxu0
      %v534 = vpop.f32.mrb[0].mxu0
      %v535 = vadd.f32 0.0, %v534
      %v536 = vpop.f32.mrb[0].mxu0
      %537 = vmatprep.mubr.bf16.mxu0 0
      %538 = vmatmul.mubr.bf16.gmra.mrb[0].mxu0 %v386
      %v539 = vpop.f32.mrb[0].mxu0
      %v540 = vadd.f32 0.0, %v539
      %v541 = vpop.f32.mrb[0].mxu0
      %v542 = vpop.f32.mrb[0].mxu0
      %v543 = vadd.f32 0.0, %v542
      %v544 = vpop.f32.mrb[0].mxu0
      %545 = vmatprep.mubr.bf16.mxu0 0
      %546 = vmatmul.mubr.bf16.gmra.mrb[0].mxu0 %v389
      %v547 = vpop.f32.mrb[0].mxu0
      %v548 = vadd.f32 0.0, %v547
      %v549 = vpop.f32.mrb[0].mxu0
      %v550 = vpop.f32.mrb[0].mxu0
      %v551 = vadd.f32 0.0, %v550
      %v552 = vpop.f32.mrb[0].mxu0
      %553 = vmatprep.mubr.bf16.mxu0 0
      %554 = vmatmul.mubr.bf16.gmra.mrb[0].mxu0 %v392
      %v555 = vpop.f32.mrb[0].mxu0
      %v556 = vadd.f32 0.0, %v555
      %v557 = vpop.f32.mrb[0].mxu0
      %v558 = vpop.f32.mrb[0].mxu0
      %v559 = vadd.f32 0.0, %v558
      %v560 = vpop.f32.mrb[0].mxu0
      %561 = vdwg.mxu0
      %v564 = vunpack.c.l.b16 %v208
      %v565 = vunpack.c.l.b16 %v209
      %v566 = vpack.c.b16 %v565, %v564
      %v568 = vsel %vm345, %v566, 0
      %v571 = vand.u32 %v262, %v397
      %573 = vmatprep.subr.bf16.mxu0 0
      %574 = vmatpush1.bf16.msra.mxu0 %v571
      %575 = vmatprep.subr.bf16.mxu0 0
      %576 = vmatpush1.bf16.msra.mxu0 0
      %577 = vmatprep.subr.bf16.mxu0 0
      %578 = vmatpush1.bf16.msra.mxu0 0
      %579 = vmatprep.subr.bf16.mxu0 0
      %580 = vmatpush1.bf16.msra.mxu0 0
      %581 = vmatprep.subr.bf16.mxu0 0
      %582 = vmatpush1.bf16.msra.mxu0 0
      %583 = vmatprep.subr.bf16.mxu0 0
      %584 = vmatpush1.bf16.msra.mxu0 0
      %585 = vmatprep.subr.bf16.mxu0 0
      %586 = vmatpush1.bf16.msra.mxu0 0
      %587 = vmatprep.subr.bf16.mxu0 0
      %588 = vmatpush1.bf16.msra.mxu0 0
      %589 = vmatprep.subr.bf16.mxu0 0
      %590 = vmatpush1.bf16.msra.mxu0 0
      %591 = vmatprep.subr.bf16.mxu0 0
      %592 = vmatpush1.bf16.msra.mxu0 0
      %593 = vmatprep.subr.bf16.mxu0 0
      %594 = vmatpush1.bf16.msra.mxu0 0
      %595 = vmatprep.subr.bf16.mxu0 0
      %596 = vmatpush1.bf16.msra.mxu0 0
      %597 = vmatprep.subr.bf16.mxu0 0
      %598 = vmatpush1.bf16.msra.mxu0 0
      %599 = vmatprep.subr.bf16.mxu0 0
      %600 = vmatpush1.bf16.msra.mxu0 0
      %601 = vmatprep.subr.bf16.mxu0 0
      %602 = vmatpush1.bf16.msra.mxu0 0
      %603 = vmatprep.subr.bf16.mxu0 0
      %604 = vmatpush1.bf16.msra.mxu0 0
      %605 = vmatprep.mubr.bf16.mxu0 0
      %606 = vmatmul.mubr.bf16.gmra.mrb[0].mxu0 %v568
      %v607 = vpop.f32.mrb[0].mxu0
      %v608 = vadd.f32 %v436, %v607
      %v609 = vpop.f32.mrb[0].mxu0
      %v610 = vpop.f32.mrb[0].mxu0
      %v611 = vadd.f32 %v439, %v610
      %v612 = vpop.f32.mrb[0].mxu0
      %613 = vmatprep.mubr.bf16.mxu0 0
      %614 = vmatmul.mubr.bf16.gmra.mrb[0].mxu0 %v347
      %v615 = vpop.f32.mrb[0].mxu0
      %v616 = vadd.f32 %v444, %v615
      %v617 = vpop.f32.mrb[0].mxu0
      %v618 = vpop.f32.mrb[0].mxu0
      %v619 = vadd.f32 %v447, %v618
      %v620 = vpop.f32.mrb[0].mxu0
      %621 = vmatprep.mubr.bf16.mxu0 0
      %622 = vmatmul.mubr.bf16.gmra.mrb[0].mxu0 %v350
      %v623 = vpop.f32.mrb[0].mxu0
      %v624 = vadd.f32 %v452, %v623
      %v625 = vpop.f32.mrb[0].mxu0
      %v626 = vpop.f32.mrb[0].mxu0
      %v627 = vadd.f32 %v455, %v626
      %v628 = vpop.f32.mrb[0].mxu0
      %629 = vmatprep.mubr.bf16.mxu0 0
      %630 = vmatmul.mubr.bf16.gmra.mrb[0].mxu0 %v353
      %v631 = vpop.f32.mrb[0].mxu0
      %v632 = vadd.f32 %v460, %v631
      %v633 = vpop.f32.mrb[0].mxu0
      %v634 = vpop.f32.mrb[0].mxu0
      %v635 = vadd.f32 %v463, %v634
      %v636 = vpop.f32.mrb[0].mxu0
      %637 = vmatprep.mubr.bf16.mxu0 0
      %638 = vmatmul.mubr.bf16.gmra.mrb[0].mxu0 %v356
      %v639 = vpop.f32.mrb[0].mxu0
      %v640 = vadd.f32 %v468, %v639
      %v641 = vpop.f32.mrb[0].mxu0
      %v642 = vpop.f32.mrb[0].mxu0
      %v643 = vadd.f32 %v471, %v642
      %v644 = vpop.f32.mrb[0].mxu0
      %645 = vmatprep.mubr.bf16.mxu0 0
      %646 = vmatmul.mubr.bf16.gmra.mrb[0].mxu0 %v359
      %v647 = vpop.f32.mrb[0].mxu0
      %v648 = vadd.f32 %v476, %v647
      %v649 = vpop.f32.mrb[0].mxu0
      %v650 = vpop.f32.mrb[0].mxu0
      %v651 = vadd.f32 %v479, %v650
      %v652 = vpop.f32.mrb[0].mxu0
      %653 = vmatprep.mubr.bf16.mxu0 0
      %654 = vmatmul.mubr.bf16.gmra.mrb[0].mxu0 %v362
      %v655 = vpop.f32.mrb[0].mxu0
      %v656 = vadd.f32 %v484, %v655
      %v657 = vpop.f32.mrb[0].mxu0
      %v658 = vpop.f32.mrb[0].mxu0
      %v659 = vadd.f32 %v487, %v658
      %v660 = vpop.f32.mrb[0].mxu0
      %661 = vmatprep.mubr.bf16.mxu0 0
      %662 = vmatmul.mubr.bf16.gmra.mrb[0].mxu0 %v365
      %v663 = vpop.f32.mrb[0].mxu0
      %v664 = vadd.f32 %v492, %v663
      %v665 = vpop.f32.mrb[0].mxu0
      %v666 = vpop.f32.mrb[0].mxu0
      %v667 = vadd.f32 %v495, %v666
      %v668 = vpop.f32.mrb[0].mxu0
      %669 = vmatprep.mubr.bf16.mxu0 0
      %670 = vmatmul.mubr.bf16.gmra.mrb[0].mxu0 %v368
      %v671 = vpop.f32.mrb[0].mxu0
      %v672 = vadd.f32 %v500, %v671
      %v673 = vpop.f32.mrb[0].mxu0
      %v674 = vpop.f32.mrb[0].mxu0
      %v675 = vadd.f32 %v503, %v674
      %v676 = vpop.f32.mrb[0].mxu0
      %677 = vmatprep.mubr.bf16.mxu0 0
      %678 = vmatmul.mubr.bf16.gmra.mrb[0].mxu0 %v371
      %v679 = vpop.f32.mrb[0].mxu0
      %v680 = vadd.f32 %v508, %v679
      %v681 = vpop.f32.mrb[0].mxu0
      %v682 = vpop.f32.mrb[0].mxu0
      %v683 = vadd.f32 %v511, %v682
      %v684 = vpop.f32.mrb[0].mxu0
      %685 = vmatprep.mubr.bf16.mxu0 0
      %686 = vmatmul.mubr.bf16.gmra.mrb[0].mxu0 %v374
      %v687 = vpop.f32.mrb[0].mxu0
      %v688 = vadd.f32 %v516, %v687
      %v689 = vpop.f32.mrb[0].mxu0
      %v690 = vpop.f32.mrb[0].mxu0
      %v691 = vadd.f32 %v519, %v690
      %v692 = vpop.f32.mrb[0].mxu0
      %693 = vmatprep.mubr.bf16.mxu0 0
      %694 = vmatmul.mubr.bf16.gmra.mrb[0].mxu0 %v377
      %v695 = vpop.f32.mrb[0].mxu0
      %v696 = vadd.f32 %v524, %v695
      %v697 = vpop.f32.mrb[0].mxu0
      %v698 = vpop.f32.mrb[0].mxu0
      %v699 = vadd.f32 %v527, %v698
      %v700 = vpop.f32.mrb[0].mxu0
      %701 = vmatprep.mubr.bf16.mxu0 0
      %702 = vmatmul.mubr.bf16.gmra.mrb[0].mxu0 %v380
      %v703 = vpop.f32.mrb[0].mxu0
      %v704 = vadd.f32 %v532, %v703
      %v705 = vpop.f32.mrb[0].mxu0
      %v706 = vpop.f32.mrb[0].mxu0
      %v707 = vadd.f32 %v535, %v706
      %v708 = vpop.f32.mrb[0].mxu0
      %709 = vmatprep.mubr.bf16.mxu0 0
      %710 = vmatmul.mubr.bf16.gmra.mrb[0].mxu0 %v383
      %v711 = vpop.f32.mrb[0].mxu0
      %v712 = vadd.f32 %v540, %v711
      %v713 = vpop.f32.mrb[0].mxu0
      %v714 = vpop.f32.mrb[0].mxu0
      %v715 = vadd.f32 %v543, %v714
      %v716 = vpop.f32.mrb[0].mxu0
      %717 = vmatprep.mubr.bf16.mxu0 0
      %718 = vmatmul.mubr.bf16.gmra.mrb[0].mxu0 %v386
      %v719 = vpop.f32.mrb[0].mxu0
      %v720 = vadd.f32 %v548, %v719
      %v721 = vpop.f32.mrb[0].mxu0
      %v722 = vpop.f32.mrb[0].mxu0
      %v723 = vadd.f32 %v551, %v722
      %v724 = vpop.f32.mrb[0].mxu0
      %725 = vmatprep.mubr.bf16.mxu0 0
      %726 = vmatmul.mubr.bf16.gmra.mrb[0].mxu0 %v389
      %v727 = vpop.f32.mrb[0].mxu0
      %v728 = vadd.f32 %v556, %v727
      %v729 = vpop.f32.mrb[0].mxu0
      %v730 = vpop.f32.mrb[0].mxu0
      %v731 = vadd.f32 %v559, %v730
      %v732 = vpop.f32.mrb[0].mxu0
      %733 = vdwg.mxu0
      %s734 = scalar_lea.vmem %s1, 12
      %v735 = vld [vmem:[%s734] sm:$0x3]
      %v738 = vunpack.c.l.b16 %v259
      %v739 = vunpack.c.l.b16 %v260
      %v740 = vpack.c.b16 %v739, %v738
      %v742 = vsel %vm345, %v740, 0
      %v745 = vand.u32 %v735, %v397
      %747 = vmatprep.subr.bf16.mxu0 0
      %748 = vmatpush1.bf16.msra.mxu0 %v745
      %749 = vmatprep.subr.bf16.mxu0 0
      %750 = vmatpush1.bf16.msra.mxu0 0
      %751 = vmatprep.subr.bf16.mxu0 0
      %752 = vmatpush1.bf16.msra.mxu0 0
      %753 = vmatprep.subr.bf16.mxu0 0
      %754 = vmatpush1.bf16.msra.mxu0 0
      %755 = vmatprep.subr.bf16.mxu0 0
      %756 = vmatpush1.bf16.msra.mxu0 0
      %757 = vmatprep.subr.bf16.mxu0 0
      %758 = vmatpush1.bf16.msra.mxu0 0
      %759 = vmatprep.subr.bf16.mxu0 0
      %760 = vmatpush1.bf16.msra.mxu0 0
      %761 = vmatprep.subr.bf16.mxu0 0
      %762 = vmatpush1.bf16.msra.mxu0 0
      %763 = vmatprep.subr.bf16.mxu0 0
      %764 = vmatpush1.bf16.msra.mxu0 0
      %765 = vmatprep.subr.bf16.mxu0 0
      %766 = vmatpush1.bf16.msra.mxu0 0
      %767 = vmatprep.subr.bf16.mxu0 0
      %768 = vmatpush1.bf16.msra.mxu0 0
      %769 = vmatprep.subr.bf16.mxu0 0
      %770 = vmatpush1.bf16.msra.mxu0 0
      %771 = vmatprep.subr.bf16.mxu0 0
      %772 = vmatpush1.bf16.msra.mxu0 0
      %773 = vmatprep.subr.bf16.mxu0 0
      %774 = vmatpush1.bf16.msra.mxu0 0
      %775 = vmatprep.subr.bf16.mxu0 0
      %776 = vmatpush1.bf16.msra.mxu0 0
      %777 = vmatprep.subr.bf16.mxu0 0
      %778 = vmatpush1.bf16.msra.mxu0 0
      %779 = vmatprep.mubr.bf16.mxu0 0
      %780 = vmatmul.mubr.bf16.gmra.mrb[0].mxu0 %v350
      %v781 = vpop.f32.mrb[0].mxu0
      %v782 = vadd.f32 0.0, %v781
      %v783 = vpop.f32.mrb[0].mxu0
      %v784 = vpop.f32.mrb[0].mxu0
      %v785 = vadd.f32 0.0, %v784
      %v786 = vpop.f32.mrb[0].mxu0
      %787 = vmatprep.mubr.bf16.mxu0 0
      %788 = vmatmul.mubr.bf16.gmra.mrb[0].mxu0 %v353
      %v789 = vpop.f32.mrb[0].mxu0
      %v790 = vadd.f32 0.0, %v789
      %v791 = vpop.f32.mrb[0].mxu0
      %v792 = vpop.f32.mrb[0].mxu0
      %v793 = vadd.f32 0.0, %v792
      %v794 = vpop.f32.mrb[0].mxu0
      %795 = vmatprep.mubr.bf16.mxu0 0
      %796 = vmatmul.mubr.bf16.gmra.mrb[0].mxu0 %v356
      %v797 = vpop.f32.mrb[0].mxu0
      %v798 = vadd.f32 0.0, %v797
      %v799 = vpop.f32.mrb[0].mxu0
      %v800 = vpop.f32.mrb[0].mxu0
      %v801 = vadd.f32 0.0, %v800
      %v802 = vpop.f32.mrb[0].mxu0
      %803 = vmatprep.mubr.bf16.mxu0 0
      %804 = vmatmul.mubr.bf16.gmra.mrb[0].mxu0 %v359
      %v805 = vpop.f32.mrb[0].mxu0
      %v806 = vadd.f32 0.0, %v805
      %v807 = vpop.f32.mrb[0].mxu0
      %v808 = vpop.f32.mrb[0].mxu0
      %v809 = vadd.f32 0.0, %v808
      %v810 = vpop.f32.mrb[0].mxu0
      %811 = vmatprep.mubr.bf16.mxu0 0
      %812 = vmatmul.mubr.bf16.gmra.mrb[0].mxu0 %v362
      %v813 = vpop.f32.mrb[0].mxu0
      %v814 = vadd.f32 0.0, %v813
      %v815 = vpop.f32.mrb[0].mxu0
      %v816 = vpop.f32.mrb[0].mxu0
      %v817 = vadd.f32 0.0, %v816
      %v818 = vpop.f32.mrb[0].mxu0
      %819 = vmatprep.mubr.bf16.mxu0 0
      %820 = vmatmul.mubr.bf16.gmra.mrb[0].mxu0 %v365
      %v821 = vpop.f32.mrb[0].mxu0
      %v822 = vadd.f32 0.0, %v821
      %v823 = vpop.f32.mrb[0].mxu0
      %v824 = vpop.f32.mrb[0].mxu0
      %v825 = vadd.f32 0.0, %v824
      %v826 = vpop.f32.mrb[0].mxu0
      %827 = vmatprep.mubr.bf16.mxu0 0
      %828 = vmatmul.mubr.bf16.gmra.mrb[0].mxu0 %v368
      %v829 = vpop.f32.mrb[0].mxu0
      %v830 = vadd.f32 0.0, %v829
      %v831 = vpop.f32.mrb[0].mxu0
      %v832 = vpop.f32.mrb[0].mxu0
      %v833 = vadd.f32 0.0, %v832
      %v834 = vpop.f32.mrb[0].mxu0
      %835 = vmatprep.mubr.bf16.mxu0 0
      %836 = vmatmul.mubr.bf16.gmra.mrb[0].mxu0 %v371
      %v837 = vpop.f32.mrb[0].mxu0
      %v838 = vadd.f32 0.0, %v837
      %v839 = vpop.f32.mrb[0].mxu0
      %v840 = vpop.f32.mrb[0].mxu0
      %v841 = vadd.f32 0.0, %v840
      %v842 = vpop.f32.mrb[0].mxu0
      %843 = vmatprep.mubr.bf16.mxu0 0
      %844 = vmatmul.mubr.bf16.gmra.mrb[0].mxu0 %v374
      %v845 = vpop.f32.mrb[0].mxu0
      %v846 = vadd.f32 0.0, %v845
      %v847 = vpop.f32.mrb[0].mxu0
      %v848 = vpop.f32.mrb[0].mxu0
      %v849 = vadd.f32 0.0, %v848
      %v850 = vpop.f32.mrb[0].mxu0
      %851 = vmatprep.mubr.bf16.mxu0 0
      %852 = vmatmul.mubr.bf16.gmra.mrb[0].mxu0 %v377
      %v853 = vpop.f32.mrb[0].mxu0
      %v854 = vadd.f32 0.0, %v853
      %v855 = vpop.f32.mrb[0].mxu0
      %v856 = vpop.f32.mrb[0].mxu0
      %v857 = vadd.f32 0.0, %v856
      %v858 = vpop.f32.mrb[0].mxu0
      %859 = vmatprep.mubr.bf16.mxu0 0
      %860 = vmatmul.mubr.bf16.gmra.mrb[0].mxu0 %v380
      %v861 = vpop.f32.mrb[0].mxu0
      %v862 = vadd.f32 0.0, %v861
      %v863 = vpop.f32.mrb[0].mxu0
      %v864 = vpop.f32.mrb[0].mxu0
      %v865 = vadd.f32 0.0, %v864
      %v866 = vpop.f32.mrb[0].mxu0
      %867 = vmatprep.mubr.bf16.mxu0 0
      %868 = vmatmul.mubr.bf16.gmra.mrb[0].mxu0 %v383
      %v869 = vpop.f32.mrb[0].mxu0
      %v870 = vadd.f32 0.0, %v869
      %v871 = vpop.f32.mrb[0].mxu0
      %v872 = vpop.f32.mrb[0].mxu0
      %v873 = vadd.f32 0.0, %v872
      %v874 = vpop.f32.mrb[0].mxu0
      %875 = vmatprep.mubr.bf16.mxu0 0
      %876 = vmatmul.mubr.bf16.gmra.mrb[0].mxu0 %v386
      %v877 = vpop.f32.mrb[0].mxu0
      %v878 = vadd.f32 0.0, %v877
      %v879 = vpop.f32.mrb[0].mxu0
      %v880 = vpop.f32.mrb[0].mxu0
      %v881 = vadd.f32 0.0, %v880
      %v882 = vpop.f32.mrb[0].mxu0
      %883 = vmatprep.mubr.bf16.mxu0 0
      %884 = vmatmul.mubr.bf16.gmra.mrb[0].mxu0 %v389
      %v885 = vpop.f32.mrb[0].mxu0
      %v886 = vadd.f32 0.0, %v885
      %v887 = vpop.f32.mrb[0].mxu0
      %v888 = vpop.f32.mrb[0].mxu0
      %v889 = vadd.f32 0.0, %v888
      %v890 = vpop.f32.mrb[0].mxu0
      %891 = vmatprep.mubr.bf16.mxu0 0
      %892 = vmatmul.mubr.bf16.gmra.mrb[0].mxu0 %v392
      %v893 = vpop.f32.mrb[0].mxu0
      %v894 = vadd.f32 0.0, %v893
      %v895 = vpop.f32.mrb[0].mxu0
      %v896 = vpop.f32.mrb[0].mxu0
      %v897 = vadd.f32 0.0, %v896
      %v898 = vpop.f32.mrb[0].mxu0
      %899 = vmatprep.mubr.bf16.mxu0 0
      %900 = vmatmul.mubr.bf16.gmra.mrb[0].mxu0 %v742
      %v901 = vpop.f32.mrb[0].mxu0
      %v902 = vadd.f32 0.0, %v901
      %v903 = vpop.f32.mrb[0].mxu0
      %v904 = vpop.f32.mrb[0].mxu0
      %v905 = vadd.f32 0.0, %v904
      %v906 = vpop.f32.mrb[0].mxu0
      %907 = vdwg.mxu0
      %v908 = vadd.f32 %v608, %v782
      %v909 = vadd.f32 %v611, %v785
      %v910 = vadd.f32 %v616, %v790
      %v911 = vadd.f32 %v619, %v793
      %v912 = vadd.f32 %v624, %v798
      %v913 = vadd.f32 %v627, %v801
      %v914 = vadd.f32 %v632, %v806
      %v915 = vadd.f32 %v635, %v809
      %v916 = vadd.f32 %v640, %v814
      %v917 = vadd.f32 %v643, %v817
      %v918 = vadd.f32 %v648, %v822
      %v919 = vadd.f32 %v651, %v825
      %v920 = vadd.f32 %v656, %v830
      %v921 = vadd.f32 %v659, %v833
      %v922 = vadd.f32 %v664, %v838
      %v923 = vadd.f32 %v667, %v841
      %v924 = vadd.f32 %v672, %v846
      %v925 = vadd.f32 %v675, %v849
      %v926 = vadd.f32 %v680, %v854
      %v927 = vadd.f32 %v683, %v857
      %v928 = vadd.f32 %v688, %v862
      %v929 = vadd.f32 %v691, %v865
      %v930 = vadd.f32 %v696, %v870
      %v931 = vadd.f32 %v699, %v873
      %v932 = vadd.f32 %v704, %v878
      %v933 = vadd.f32 %v707, %v881
      %v934 = vadd.f32 %v712, %v886
      %v935 = vadd.f32 %v715, %v889
      %v936 = vadd.f32 %v720, %v894
      %v937 = vadd.f32 %v723, %v897
      %v938 = vadd.f32 %v728, %v902
      %v939 = vadd.f32 %v731, %v905
      %vm940 = vsmask.f32 3328
      %vm941 = vsmask.f32 7440
      %vm942 = vmor %vm940, %vm941
      %v944 = vshrl.u32 %v208, 16
      %v946 = vrot.slane %v944, 4
      %v947 = vshll.u32 %v208, 16
      %v949 = vrot.slane %v947, 5
      %v950 = vor.u32 %v946, %v949
      %v951 = vrot.slane %v950, 4
      %v953 = vshll.u32 %v209, 16
      %v955 = vrot.slane %v953, 5
      %v956 = vsel %vm942, %v951, %v955
      %v957 = vshrl.u32 %v209, 16
      %v959 = vrot.slane %v957, 4
      %v960 = vor.u32 %v959, %v955
      %v961 = vrot.slane %v960, 4
      %v963 = vshll.u32 %v210, 16
      %v965 = vrot.slane %v963, 5
      %v966 = vsel %vm942, %v961, %v965
      %v968 = vshrl.u32 %v211, 16
      %v970 = vrot.slane %v968, 4
      %v971 = vshll.u32 %v211, 16
      %v973 = vrot.slane %v971, 5
      %v974 = vor.u32 %v970, %v973
      %v975 = vrot.slane %v974, 4
      %v977 = vshll.u32 %v212, 16
      %v979 = vrot.slane %v977, 5
      %v980 = vsel %vm942, %v975, %v979
      %v981 = vshrl.u32 %v212, 16
      %v983 = vrot.slane %v981, 4
      %v984 = vor.u32 %v983, %v979
      %v985 = vrot.slane %v984, 4
      %v987 = vshll.u32 %v213, 16
      %v989 = vrot.slane %v987, 5
      %v990 = vsel %vm942, %v985, %v989
      %v992 = vshrl.u32 %v214, 16
      %v994 = vrot.slane %v992, 4
      %v995 = vshll.u32 %v214, 16
      %v997 = vrot.slane %v995, 5
      %v998 = vor.u32 %v994, %v997
      %v999 = vrot.slane %v998, 4
      %v1001 = vshll.u32 %v215, 16
      %v1003 = vrot.slane %v1001, 5
      %v1004 = vsel %vm942, %v999, %v1003
      %v1005 = vshrl.u32 %v215, 16
      %v1007 = vrot.slane %v1005, 4
      %v1008 = vor.u32 %v1007, %v1003
      %v1009 = vrot.slane %v1008, 4
      %v1011 = vshll.u32 %v216, 16
      %v1013 = vrot.slane %v1011, 5
      %v1014 = vsel %vm942, %v1009, %v1013
      %v1016 = vshrl.u32 %v217, 16
      %v1018 = vrot.slane %v1016, 4
      %v1019 = vshll.u32 %v217, 16
      %v1021 = vrot.slane %v1019, 5
      %v1022 = vor.u32 %v1018, %v1021
      %v1023 = vrot.slane %v1022, 4
      %v1025 = vshll.u32 %v218, 16
      %v1027 = vrot.slane %v1025, 5
      %v1028 = vsel %vm942, %v1023, %v1027
      %v1029 = vshrl.u32 %v218, 16
      %v1031 = vrot.slane %v1029, 4
      %v1032 = vor.u32 %v1031, %v1027
      %v1033 = vrot.slane %v1032, 4
      %v1035 = vshll.u32 %v219, 16
      %v1037 = vrot.slane %v1035, 5
      %v1038 = vsel %vm942, %v1033, %v1037
      %v1040 = vshrl.u32 %v220, 16
      %v1042 = vrot.slane %v1040, 4
      %v1043 = vshll.u32 %v220, 16
      %v1045 = vrot.slane %v1043, 5
      %v1046 = vor.u32 %v1042, %v1045
      %v1047 = vrot.slane %v1046, 4
      %v1049 = vshll.u32 %v221, 16
      %v1051 = vrot.slane %v1049, 5
      %v1052 = vsel %vm942, %v1047, %v1051
      %v1053 = vshrl.u32 %v221, 16
      %v1055 = vrot.slane %v1053, 4
      %v1056 = vor.u32 %v1055, %v1051
      %v1057 = vrot.slane %v1056, 4
      %v1059 = vshll.u32 %v222, 16
      %v1061 = vrot.slane %v1059, 5
      %v1062 = vsel %vm942, %v1057, %v1061
      %v1064 = vshrl.u32 %v223, 16
      %v1066 = vrot.slane %v1064, 4
      %v1067 = vshll.u32 %v223, 16
      %v1069 = vrot.slane %v1067, 5
      %v1070 = vor.u32 %v1066, %v1069
      %v1071 = vrot.slane %v1070, 4
      %v1073 = vshll.u32 %v224, 16
      %v1075 = vrot.slane %v1073, 5
      %v1076 = vsel %vm942, %v1071, %v1075
      %v1077 = vshrl.u32 %v224, 16
      %v1079 = vrot.slane %v1077, 4
      %v1080 = vor.u32 %v1079, %v1075
      %v1081 = vrot.slane %v1080, 4
      %v1083 = vshll.u32 %v225, 16
      %v1085 = vrot.slane %v1083, 5
      %v1086 = vsel %vm942, %v1081, %v1085
      %v1088 = vshrl.u32 %v226, 16
      %v1090 = vrot.slane %v1088, 4
      %v1091 = vshll.u32 %v226, 16
      %v1093 = vrot.slane %v1091, 5
      %v1094 = vor.u32 %v1090, %v1093
      %v1095 = vrot.slane %v1094, 4
      %v1097 = vshll.u32 %v227, 16
      %v1099 = vrot.slane %v1097, 5
      %v1100 = vsel %vm942, %v1095, %v1099
      %v1101 = vshrl.u32 %v227, 16
      %v1103 = vrot.slane %v1101, 4
      %v1104 = vor.u32 %v1103, %v1099
      %v1105 = vrot.slane %v1104, 4
      %v1107 = vshll.u32 %v228, 16
      %v1109 = vrot.slane %v1107, 5
      %v1110 = vsel %vm942, %v1105, %v1109
      %v1112 = vshrl.u32 %v229, 16
      %v1114 = vrot.slane %v1112, 4
      %v1115 = vshll.u32 %v229, 16
      %v1117 = vrot.slane %v1115, 5
      %v1118 = vor.u32 %v1114, %v1117
      %v1119 = vrot.slane %v1118, 4
      %v1121 = vshll.u32 %v230, 16
      %v1123 = vrot.slane %v1121, 5
      %v1124 = vsel %vm942, %v1119, %v1123
      %v1125 = vshrl.u32 %v230, 16
      %v1127 = vrot.slane %v1125, 4
      %v1128 = vor.u32 %v1127, %v1123
      %v1129 = vrot.slane %v1128, 4
      %v1131 = vshll.u32 %v231, 16
      %v1133 = vrot.slane %v1131, 5
      %v1134 = vsel %vm942, %v1129, %v1133
      %v1136 = vshrl.u32 %v232, 16
      %v1138 = vrot.slane %v1136, 4
      %v1139 = vshll.u32 %v232, 16
      %v1141 = vrot.slane %v1139, 5
      %v1142 = vor.u32 %v1138, %v1141
      %v1143 = vrot.slane %v1142, 4
      %v1145 = vshll.u32 %v233, 16
      %v1147 = vrot.slane %v1145, 5
      %v1148 = vsel %vm942, %v1143, %v1147
      %v1149 = vshrl.u32 %v233, 16
      %v1151 = vrot.slane %v1149, 4
      %v1152 = vor.u32 %v1151, %v1147
      %v1153 = vrot.slane %v1152, 4
      %v1155 = vshll.u32 %v234, 16
      %v1157 = vrot.slane %v1155, 5
      %v1158 = vsel %vm942, %v1153, %v1157
      %v1160 = vshrl.u32 %v235, 16
      %v1162 = vrot.slane %v1160, 4
      %v1163 = vshll.u32 %v235, 16
      %v1165 = vrot.slane %v1163, 5
      %v1166 = vor.u32 %v1162, %v1165
      %v1167 = vrot.slane %v1166, 4
      %v1169 = vshll.u32 %v236, 16
      %v1171 = vrot.slane %v1169, 5
      %v1172 = vsel %vm942, %v1167, %v1171
      %v1173 = vshrl.u32 %v236, 16
      %v1175 = vrot.slane %v1173, 4
      %v1176 = vor.u32 %v1175, %v1171
      %v1177 = vrot.slane %v1176, 4
      %v1179 = vshll.u32 %v237, 16
      %v1181 = vrot.slane %v1179, 5
      %v1182 = vsel %vm942, %v1177, %v1181
      %v1184 = vshrl.u32 %v238, 16
      %v1186 = vrot.slane %v1184, 4
      %v1187 = vshll.u32 %v238, 16
      %v1189 = vrot.slane %v1187, 5
      %v1190 = vor.u32 %v1186, %v1189
      %v1191 = vrot.slane %v1190, 4
      %v1193 = vshll.u32 %v239, 16
      %v1195 = vrot.slane %v1193, 5
      %v1196 = vsel %vm942, %v1191, %v1195
      %v1197 = vshrl.u32 %v239, 16
      %v1199 = vrot.slane %v1197, 4
      %v1200 = vor.u32 %v1199, %v1195
      %v1201 = vrot.slane %v1200, 4
      %v1203 = vshll.u32 %v240, 16
      %v1205 = vrot.slane %v1203, 5
      %v1206 = vsel %vm942, %v1201, %v1205
      %v1208 = vshrl.u32 %v241, 16
      %v1210 = vrot.slane %v1208, 4
      %v1211 = vshll.u32 %v241, 16
      %v1213 = vrot.slane %v1211, 5
      %v1214 = vor.u32 %v1210, %v1213
      %v1215 = vrot.slane %v1214, 4
      %v1217 = vshll.u32 %v242, 16
      %v1219 = vrot.slane %v1217, 5
      %v1220 = vsel %vm942, %v1215, %v1219
      %v1221 = vshrl.u32 %v242, 16
      %v1223 = vrot.slane %v1221, 4
      %v1224 = vor.u32 %v1223, %v1219
      %v1225 = vrot.slane %v1224, 4
      %v1227 = vshll.u32 %v243, 16
      %v1229 = vrot.slane %v1227, 5
      %v1230 = vsel %vm942, %v1225, %v1229
      %v1232 = vshrl.u32 %v244, 16
      %v1234 = vrot.slane %v1232, 4
      %v1235 = vshll.u32 %v244, 16
      %v1237 = vrot.slane %v1235, 5
      %v1238 = vor.u32 %v1234, %v1237
      %v1239 = vrot.slane %v1238, 4
      %v1241 = vshll.u32 %v245, 16
      %v1243 = vrot.slane %v1241, 5
      %v1244 = vsel %vm942, %v1239, %v1243
      %v1245 = vshrl.u32 %v245, 16
      %v1247 = vrot.slane %v1245, 4
      %v1248 = vor.u32 %v1247, %v1243
      %v1249 = vrot.slane %v1248, 4
      %v1251 = vshll.u32 %v246, 16
      %v1253 = vrot.slane %v1251, 5
      %v1254 = vsel %vm942, %v1249, %v1253
      %v1256 = vshrl.u32 %v247, 16
      %v1258 = vrot.slane %v1256, 4
      %v1259 = vshll.u32 %v247, 16
      %v1261 = vrot.slane %v1259, 5
      %v1262 = vor.u32 %v1258, %v1261
      %v1263 = vrot.slane %v1262, 4
      %v1265 = vshll.u32 %v248, 16
      %v1267 = vrot.slane %v1265, 5
      %v1268 = vsel %vm942, %v1263, %v1267
      %v1269 = vshrl.u32 %v248, 16
      %v1271 = vrot.slane %v1269, 4
      %v1272 = vor.u32 %v1271, %v1267
      %v1273 = vrot.slane %v1272, 4
      %v1275 = vshll.u32 %v249, 16
      %v1277 = vrot.slane %v1275, 5
      %v1278 = vsel %vm942, %v1273, %v1277
      %v1280 = vshrl.u32 %v250, 16
      %v1282 = vrot.slane %v1280, 4
      %v1283 = vshll.u32 %v250, 16
      %v1285 = vrot.slane %v1283, 5
      %v1286 = vor.u32 %v1282, %v1285
      %v1287 = vrot.slane %v1286, 4
      %v1289 = vshll.u32 %v251, 16
      %v1291 = vrot.slane %v1289, 5
      %v1292 = vsel %vm942, %v1287, %v1291
      %v1293 = vshrl.u32 %v251, 16
      %v1295 = vrot.slane %v1293, 4
      %v1296 = vor.u32 %v1295, %v1291
      %v1297 = vrot.slane %v1296, 4
      %v1299 = vshll.u32 %v252, 16
      %v1301 = vrot.slane %v1299, 5
      %v1302 = vsel %vm942, %v1297, %v1301
      %v1304 = vshrl.u32 %v253, 16
      %v1306 = vrot.slane %v1304, 4
      %v1307 = vshll.u32 %v253, 16
      %v1309 = vrot.slane %v1307, 5
      %v1310 = vor.u32 %v1306, %v1309
      %v1311 = vrot.slane %v1310, 4
      %v1313 = vshll.u32 %v254, 16
      %v1315 = vrot.slane %v1313, 5
      %v1316 = vsel %vm942, %v1311, %v1315
      %v1317 = vshrl.u32 %v254, 16
      %v1319 = vrot.slane %v1317, 4
      %v1320 = vor.u32 %v1319, %v1315
      %v1321 = vrot.slane %v1320, 4
      %v1323 = vshll.u32 %v255, 16
      %v1325 = vrot.slane %v1323, 5
      %v1326 = vsel %vm942, %v1321, %v1325
      %s1327 = scalar_lea.vmem %s1, 2
      %v1328 = vld [vmem:[%s1327] sm:$0x3]
      %v1329 = vunpack.c.l.b16 %v956
      %v1330 = vunpack.c.l.b16 %v966
      %v1331 = vunpack.c.l.b16 %v980
      %v1332 = vunpack.c.l.b16 %v990
      %v1333 = vunpack.c.l.b16 %v1004
      %v1334 = vunpack.c.l.b16 %v1014
      %v1335 = vunpack.c.l.b16 %v1028
      %v1336 = vunpack.c.l.b16 %v1038
      %v1337 = vunpack.c.l.b16 %v1052
      %v1338 = vunpack.c.l.b16 %v1062
      %v1339 = vunpack.c.l.b16 %v1076
      %v1340 = vunpack.c.l.b16 %v1086
      %v1341 = vunpack.c.l.b16 %v1100
      %v1342 = vunpack.c.l.b16 %v1110
      %v1343 = vunpack.c.l.b16 %v1124
      %v1344 = vunpack.c.l.b16 %v1134
      %v1345 = vunpack.c.l.b16 %v1148
      %v1346 = vunpack.c.l.b16 %v1158
      %v1347 = vunpack.c.l.b16 %v1172
      %v1348 = vunpack.c.l.b16 %v1182
      %v1349 = vunpack.c.l.b16 %v1196
      %v1350 = vunpack.c.l.b16 %v1206
      %v1351 = vunpack.c.l.b16 %v1220
      %v1352 = vunpack.c.l.b16 %v1230
      %v1353 = vunpack.c.l.b16 %v1244
      %v1354 = vunpack.c.l.b16 %v1254
      %v1355 = vunpack.c.l.b16 %v1268
      %v1356 = vunpack.c.l.b16 %v1278
      %v1357 = vunpack.c.l.b16 %v1292
      %v1358 = vunpack.c.l.b16 %v1302
      %v1359 = vunpack.c.l.b16 %v1316
      %v1360 = vunpack.c.l.b16 %v1326
      %v1361 = vpack.c.b16 %v1330, %v1329
      %v1362 = vpack.c.b16 %v1332, %v1331
      %v1363 = vpack.c.b16 %v1334, %v1333
      %v1364 = vpack.c.b16 %v1336, %v1335
      %v1365 = vpack.c.b16 %v1338, %v1337
      %v1366 = vpack.c.b16 %v1340, %v1339
      %v1367 = vpack.c.b16 %v1342, %v1341
      %v1368 = vpack.c.b16 %v1344, %v1343
      %v1369 = vpack.c.b16 %v1346, %v1345
      %v1370 = vpack.c.b16 %v1348, %v1347
      %v1371 = vpack.c.b16 %v1350, %v1349
      %v1372 = vpack.c.b16 %v1352, %v1351
      %v1373 = vpack.c.b16 %v1354, %v1353
      %v1374 = vpack.c.b16 %v1356, %v1355
      %v1375 = vpack.c.b16 %v1358, %v1357
      %v1376 = vpack.c.b16 %v1360, %v1359
      %v1378 = vsel %vm345, %v1361, 0
      %v1381 = vsel %vm345, %v1362, 0
      %v1384 = vsel %vm345, %v1363, 0
      %v1387 = vsel %vm345, %v1364, 0
      %v1390 = vsel %vm345, %v1365, 0
      %v1393 = vsel %vm345, %v1366, 0
      %v1396 = vsel %vm345, %v1367, 0
      %v1399 = vsel %vm345, %v1368, 0
      %v1402 = vsel %vm345, %v1369, 0
      %v1405 = vsel %vm345, %v1370, 0
      %v1408 = vsel %vm345, %v1371, 0
      %v1411 = vsel %vm345, %v1372, 0
      %v1414 = vsel %vm345, %v1373, 0
      %v1417 = vsel %vm345, %v1374, 0
      %v1420 = vsel %vm345, %v1375, 0
      %v1423 = vsel %vm345, %v1376, 0
      %v1426 = vand.u32 %v1328, %v397
      %1428 = vmatprep.subr.bf16.mxu0 0
      %1429 = vmatpush1.bf16.msra.mxu0 %v1426
      %1430 = vmatprep.subr.bf16.mxu0 0
      %1431 = vmatpush1.bf16.msra.mxu0 0
      %1432 = vmatprep.subr.bf16.mxu0 0
      %1433 = vmatpush1.bf16.msra.mxu0 0
      %1434 = vmatprep.subr.bf16.mxu0 0
      %1435 = vmatpush1.bf16.msra.mxu0 0
      %1436 = vmatprep.subr.bf16.mxu0 0
      %1437 = vmatpush1.bf16.msra.mxu0 0
      %1438 = vmatprep.subr.bf16.mxu0 0
      %1439 = vmatpush1.bf16.msra.mxu0 0
      %1440 = vmatprep.subr.bf16.mxu0 0
      %1441 = vmatpush1.bf16.msra.mxu0 0
      %1442 = vmatprep.subr.bf16.mxu0 0
      %1443 = vmatpush1.bf16.msra.mxu0 0
      %1444 = vmatprep.subr.bf16.mxu0 0
      %1445 = vmatpush1.bf16.msra.mxu0 0
      %1446 = vmatprep.subr.bf16.mxu0 0
      %1447 = vmatpush1.bf16.msra.mxu0 0
      %1448 = vmatprep.subr.bf16.mxu0 0
      %1449 = vmatpush1.bf16.msra.mxu0 0
      %1450 = vmatprep.subr.bf16.mxu0 0
      %1451 = vmatpush1.bf16.msra.mxu0 0
      %1452 = vmatprep.subr.bf16.mxu0 0
      %1453 = vmatpush1.bf16.msra.mxu0 0
      %1454 = vmatprep.subr.bf16.mxu0 0
      %1455 = vmatpush1.bf16.msra.mxu0 0
      %1456 = vmatprep.subr.bf16.mxu0 0
      %1457 = vmatpush1.bf16.msra.mxu0 0
      %1458 = vmatprep.subr.bf16.mxu0 0
      %1459 = vmatpush1.bf16.msra.mxu0 0
      %1460 = vmatprep.mubr.bf16.mxu0 0
      %1461 = vmatmul.mubr.bf16.gmra.mrb[0].mxu0 %v1378
      %v1462 = vpop.f32.mrb[0].mxu0
      %v1463 = vadd.f32 0.0, %v1462
      %v1464 = vpop.f32.mrb[0].mxu0
      %v1465 = vpop.f32.mrb[0].mxu0
      %v1466 = vadd.f32 0.0, %v1465
      %v1467 = vpop.f32.mrb[0].mxu0
      %1468 = vmatprep.mubr.bf16.mxu0 0
      %1469 = vmatmul.mubr.bf16.gmra.mrb[0].mxu0 %v1381
      %v1470 = vpop.f32.mrb[0].mxu0
      %v1471 = vadd.f32 0.0, %v1470
      %v1472 = vpop.f32.mrb[0].mxu0
      %v1473 = vpop.f32.mrb[0].mxu0
      %v1474 = vadd.f32 0.0, %v1473
      %v1475 = vpop.f32.mrb[0].mxu0
      %1476 = vmatprep.mubr.bf16.mxu0 0
      %1477 = vmatmul.mubr.bf16.gmra.mrb[0].mxu0 %v1384
      %v1478 = vpop.f32.mrb[0].mxu0
      %v1479 = vadd.f32 0.0, %v1478
      %v1480 = vpop.f32.mrb[0].mxu0
      %v1481 = vpop.f32.mrb[0].mxu0
      %v1482 = vadd.f32 0.0, %v1481
      %v1483 = vpop.f32.mrb[0].mxu0
      %1484 = vmatprep.mubr.bf16.mxu0 0
      %1485 = vmatmul.mubr.bf16.gmra.mrb[0].mxu0 %v1387
      %v1486 = vpop.f32.mrb[0].mxu0
      %v1487 = vadd.f32 0.0, %v1486
      %v1488 = vpop.f32.mrb[0].mxu0
      %v1489 = vpop.f32.mrb[0].mxu0
      %v1490 = vadd.f32 0.0, %v1489
      %v1491 = vpop.f32.mrb[0].mxu0
      %1492 = vmatprep.mubr.bf16.mxu0 0
      %1493 = vmatmul.mubr.bf16.gmra.mrb[0].mxu0 %v1390
      %v1494 = vpop.f32.mrb[0].mxu0
      %v1495 = vadd.f32 0.0, %v1494
      %v1496 = vpop.f32.mrb[0].mxu0
      %v1497 = vpop.f32.mrb[0].mxu0
      %v1498 = vadd.f32 0.0, %v1497
      %v1499 = vpop.f32.mrb[0].mxu0
      %1500 = vmatprep.mubr.bf16.mxu0 0
      %1501 = vmatmul.mubr.bf16.gmra.mrb[0].mxu0 %v1393
      %v1502 = vpop.f32.mrb[0].mxu0
      %v1503 = vadd.f32 0.0, %v1502
      %v1504 = vpop.f32.mrb[0].mxu0
      %v1505 = vpop.f32.mrb[0].mxu0
      %v1506 = vadd.f32 0.0, %v1505
      %v1507 = vpop.f32.mrb[0].mxu0
      %1508 = vmatprep.mubr.bf16.mxu0 0
      %1509 = vmatmul.mubr.bf16.gmra.mrb[0].mxu0 %v1396
      %v1510 = vpop.f32.mrb[0].mxu0
      %v1511 = vadd.f32 0.0, %v1510
      %v1512 = vpop.f32.mrb[0].mxu0
      %v1513 = vpop.f32.mrb[0].mxu0
      %v1514 = vadd.f32 0.0, %v1513
      %v1515 = vpop.f32.mrb[0].mxu0
      %1516 = vmatprep.mubr.bf16.mxu0 0
      %1517 = vmatmul.mubr.bf16.gmra.mrb[0].mxu0 %v1399
      %v1518 = vpop.f32.mrb[0].mxu0
      %v1519 = vadd.f32 0.0, %v1518
      %v1520 = vpop.f32.mrb[0].mxu0
      %v1521 = vpop.f32.mrb[0].mxu0
      %v1522 = vadd.f32 0.0, %v1521
      %v1523 = vpop.f32.mrb[0].mxu0
      %1524 = vmatprep.mubr.bf16.mxu0 0
      %1525 = vmatmul.mubr.bf16.gmra.mrb[0].mxu0 %v1402
      %v1526 = vpop.f32.mrb[0].mxu0
      %v1527 = vadd.f32 0.0, %v1526
      %v1528 = vpop.f32.mrb[0].mxu0
      %v1529 = vpop.f32.mrb[0].mxu0
      %v1530 = vadd.f32 0.0, %v1529
      %v1531 = vpop.f32.mrb[0].mxu0
      %1532 = vmatprep.mubr.bf16.mxu0 0
      %1533 = vmatmul.mubr.bf16.gmra.mrb[0].mxu0 %v1405
      %v1534 = vpop.f32.mrb[0].mxu0
      %v1535 = vadd.f32 0.0, %v1534
      %v1536 = vpop.f32.mrb[0].mxu0
      %v1537 = vpop.f32.mrb[0].mxu0
      %v1538 = vadd.f32 0.0, %v1537
      %v1539 = vpop.f32.mrb[0].mxu0
      %1540 = vmatprep.mubr.bf16.mxu0 0
      %1541 = vmatmul.mubr.bf16.gmra.mrb[0].mxu0 %v1408
      %v1542 = vpop.f32.mrb[0].mxu0
      %v1543 = vadd.f32 0.0, %v1542
      %v1544 = vpop.f32.mrb[0].mxu0
      %v1545 = vpop.f32.mrb[0].mxu0
      %v1546 = vadd.f32 0.0, %v1545
      %v1547 = vpop.f32.mrb[0].mxu0
      %1548 = vmatprep.mubr.bf16.mxu0 0
      %1549 = vmatmul.mubr.bf16.gmra.mrb[0].mxu0 %v1411
      %v1550 = vpop.f32.mrb[0].mxu0
      %v1551 = vadd.f32 0.0, %v1550
      %v1552 = vpop.f32.mrb[0].mxu0
      %v1553 = vpop.f32.mrb[0].mxu0
      %v1554 = vadd.f32 0.0, %v1553
      %v1555 = vpop.f32.mrb[0].mxu0
      %1556 = vmatprep.mubr.bf16.mxu0 0
      %1557 = vmatmul.mubr.bf16.gmra.mrb[0].mxu0 %v1414
      %v1558 = vpop.f32.mrb[0].mxu0
      %v1559 = vadd.f32 0.0, %v1558
      %v1560 = vpop.f32.mrb[0].mxu0
      %v1561 = vpop.f32.mrb[0].mxu0
      %v1562 = vadd.f32 0.0, %v1561
      %v1563 = vpop.f32.mrb[0].mxu0
      %1564 = vmatprep.mubr.bf16.mxu0 0
      %1565 = vmatmul.mubr.bf16.gmra.mrb[0].mxu0 %v1417
      %v1566 = vpop.f32.mrb[0].mxu0
      %v1567 = vadd.f32 0.0, %v1566
      %v1568 = vpop.f32.mrb[0].mxu0
      %v1569 = vpop.f32.mrb[0].mxu0
      %v1570 = vadd.f32 0.0, %v1569
      %v1571 = vpop.f32.mrb[0].mxu0
      %1572 = vmatprep.mubr.bf16.mxu0 0
      %1573 = vmatmul.mubr.bf16.gmra.mrb[0].mxu0 %v1420
      %v1574 = vpop.f32.mrb[0].mxu0
      %v1575 = vadd.f32 0.0, %v1574
      %v1576 = vpop.f32.mrb[0].mxu0
      %v1577 = vpop.f32.mrb[0].mxu0
      %v1578 = vadd.f32 0.0, %v1577
      %v1579 = vpop.f32.mrb[0].mxu0
      %1580 = vmatprep.mubr.bf16.mxu0 0
      %1581 = vmatmul.mubr.bf16.gmra.mrb[0].mxu0 %v1423
      %v1582 = vpop.f32.mrb[0].mxu0
      %v1583 = vadd.f32 0.0, %v1582
      %v1584 = vpop.f32.mrb[0].mxu0
      %v1585 = vpop.f32.mrb[0].mxu0
      %v1586 = vadd.f32 0.0, %v1585
      %v1587 = vpop.f32.mrb[0].mxu0
      %1588 = vdwg.mxu0
      %v1589 = vadd.f32 %v908, %v1463
      %v1590 = vadd.f32 %v909, %v1466
      %v1591 = vadd.f32 %v910, %v1471
      %v1592 = vadd.f32 %v911, %v1474
      %v1593 = vadd.f32 %v912, %v1479
      %v1594 = vadd.f32 %v913, %v1482
      %v1595 = vadd.f32 %v914, %v1487
      %v1596 = vadd.f32 %v915, %v1490
      %v1597 = vadd.f32 %v916, %v1495
      %v1598 = vadd.f32 %v917, %v1498
      %v1599 = vadd.f32 %v918, %v1503
      %v1600 = vadd.f32 %v919, %v1506
      %v1601 = vadd.f32 %v920, %v1511
      %v1602 = vadd.f32 %v921, %v1514
      %v1603 = vadd.f32 %v922, %v1519
      %v1604 = vadd.f32 %v923, %v1522
      %v1605 = vadd.f32 %v924, %v1527
      %v1606 = vadd.f32 %v925, %v1530
      %v1607 = vadd.f32 %v926, %v1535
      %v1608 = vadd.f32 %v927, %v1538
      %v1609 = vadd.f32 %v928, %v1543
      %v1610 = vadd.f32 %v929, %v1546
      %v1611 = vadd.f32 %v930, %v1551
      %v1612 = vadd.f32 %v931, %v1554
      %v1613 = vadd.f32 %v932, %v1559
      %v1614 = vadd.f32 %v933, %v1562
      %v1615 = vadd.f32 %v934, %v1567
      %v1616 = vadd.f32 %v935, %v1570
      %v1617 = vadd.f32 %v936, %v1575
      %v1618 = vadd.f32 %v937, %v1578
      %v1619 = vadd.f32 %v938, %v1583
      %v1620 = vadd.f32 %v939, %v1586
      %v1622 = vshrl.u32 %v256, 16
      %v1624 = vrot.slane %v1622, 4
      %v1625 = vshll.u32 %v256, 16
      %v1627 = vrot.slane %v1625, 5
      %v1628 = vor.u32 %v1624, %v1627
      %v1629 = vrot.slane %v1628, 4
      %v1631 = vshll.u32 %v257, 16
      %v1633 = vrot.slane %v1631, 5
      %v1634 = vsel %vm942, %v1629, %v1633
      %v1635 = vshrl.u32 %v257, 16
      %v1637 = vrot.slane %v1635, 4
      %v1638 = vor.u32 %v1637, %v1633
      %v1639 = vrot.slane %v1638, 4
      %v1641 = vshll.u32 %v258, 16
      %v1643 = vrot.slane %v1641, 5
      %v1644 = vsel %vm942, %v1639, %v1643
      %s1645 = scalar_lea.vmem %s1, 8
      %v1646 = vld [vmem:[%s1645] sm:$0x3]
      %v1647 = vunpack.c.l.b16 %v1634
      %v1648 = vunpack.c.l.b16 %v1644
      %v1649 = vpack.c.b16 %v1648, %v1647
      %v1651 = vsel %vm345, %v1649, 0
      %v1654 = vand.u32 %v1646, %v397
      %1656 = vmatprep.subr.bf16.mxu0 0
      %1657 = vmatpush1.bf16.msra.mxu0 %v1654
      %1658 = vmatprep.subr.bf16.mxu0 0
      %1659 = vmatpush1.bf16.msra.mxu0 0
      %1660 = vmatprep.subr.bf16.mxu0 0
      %1661 = vmatpush1.bf16.msra.mxu0 0
      %1662 = vmatprep.subr.bf16.mxu0 0
      %1663 = vmatpush1.bf16.msra.mxu0 0
      %1664 = vmatprep.subr.bf16.mxu0 0
      %1665 = vmatpush1.bf16.msra.mxu0 0
      %1666 = vmatprep.subr.bf16.mxu0 0
      %1667 = vmatpush1.bf16.msra.mxu0 0
      %1668 = vmatprep.subr.bf16.mxu0 0
      %1669 = vmatpush1.bf16.msra.mxu0 0
      %1670 = vmatprep.subr.bf16.mxu0 0
      %1671 = vmatpush1.bf16.msra.mxu0 0
      %1672 = vmatprep.subr.bf16.mxu0 0
      %1673 = vmatpush1.bf16.msra.mxu0 0
      %1674 = vmatprep.subr.bf16.mxu0 0
      %1675 = vmatpush1.bf16.msra.mxu0 0
      %1676 = vmatprep.subr.bf16.mxu0 0
      %1677 = vmatpush1.bf16.msra.mxu0 0
      %1678 = vmatprep.subr.bf16.mxu0 0
      %1679 = vmatpush1.bf16.msra.mxu0 0
      %1680 = vmatprep.subr.bf16.mxu0 0
      %1681 = vmatpush1.bf16.msra.mxu0 0
      %1682 = vmatprep.subr.bf16.mxu0 0
      %1683 = vmatpush1.bf16.msra.mxu0 0
      %1684 = vmatprep.subr.bf16.mxu0 0
      %1685 = vmatpush1.bf16.msra.mxu0 0
      %1686 = vmatprep.subr.bf16.mxu0 0
      %1687 = vmatpush1.bf16.msra.mxu0 0
      %1688 = vmatprep.mubr.bf16.mxu0 0
      %1689 = vmatmul.mubr.bf16.gmra.mrb[0].mxu0 %v1381
      %v1690 = vpop.f32.mrb[0].mxu0
      %v1691 = vadd.f32 0.0, %v1690
      %v1692 = vpop.f32.mrb[0].mxu0
      %v1693 = vpop.f32.mrb[0].mxu0
      %v1694 = vadd.f32 0.0, %v1693
      %v1695 = vpop.f32.mrb[0].mxu0
      %1696 = vmatprep.mubr.bf16.mxu0 0
      %1697 = vmatmul.mubr.bf16.gmra.mrb[0].mxu0 %v1384
      %v1698 = vpop.f32.mrb[0].mxu0
      %v1699 = vadd.f32 0.0, %v1698
      %v1700 = vpop.f32.mrb[0].mxu0
      %v1701 = vpop.f32.mrb[0].mxu0
      %v1702 = vadd.f32 0.0, %v1701
      %v1703 = vpop.f32.mrb[0].mxu0
      %1704 = vmatprep.mubr.bf16.mxu0 0
      %1705 = vmatmul.mubr.bf16.gmra.mrb[0].mxu0 %v1387
      %v1706 = vpop.f32.mrb[0].mxu0
      %v1707 = vadd.f32 0.0, %v1706
      %v1708 = vpop.f32.mrb[0].mxu0
      %v1709 = vpop.f32.mrb[0].mxu0
      %v1710 = vadd.f32 0.0, %v1709
      %v1711 = vpop.f32.mrb[0].mxu0
      %1712 = vmatprep.mubr.bf16.mxu0 0
      %1713 = vmatmul.mubr.bf16.gmra.mrb[0].mxu0 %v1390
      %v1714 = vpop.f32.mrb[0].mxu0
      %v1715 = vadd.f32 0.0, %v1714
      %v1716 = vpop.f32.mrb[0].mxu0
      %v1717 = vpop.f32.mrb[0].mxu0
      %v1718 = vadd.f32 0.0, %v1717
      %v1719 = vpop.f32.mrb[0].mxu0
      %1720 = vmatprep.mubr.bf16.mxu0 0
      %1721 = vmatmul.mubr.bf16.gmra.mrb[0].mxu0 %v1393
      %v1722 = vpop.f32.mrb[0].mxu0
      %v1723 = vadd.f32 0.0, %v1722
      %v1724 = vpop.f32.mrb[0].mxu0
      %v1725 = vpop.f32.mrb[0].mxu0
      %v1726 = vadd.f32 0.0, %v1725
      %v1727 = vpop.f32.mrb[0].mxu0
      %1728 = vmatprep.mubr.bf16.mxu0 0
      %1729 = vmatmul.mubr.bf16.gmra.mrb[0].mxu0 %v1396
      %v1730 = vpop.f32.mrb[0].mxu0
      %v1731 = vadd.f32 0.0, %v1730
      %v1732 = vpop.f32.mrb[0].mxu0
      %v1733 = vpop.f32.mrb[0].mxu0
      %v1734 = vadd.f32 0.0, %v1733
      %v1735 = vpop.f32.mrb[0].mxu0
      %1736 = vmatprep.mubr.bf16.mxu0 0
      %1737 = vmatmul.mubr.bf16.gmra.mrb[0].mxu0 %v1399
      %v1738 = vpop.f32.mrb[0].mxu0
      %v1739 = vadd.f32 0.0, %v1738
      %v1740 = vpop.f32.mrb[0].mxu0
      %v1741 = vpop.f32.mrb[0].mxu0
      %v1742 = vadd.f32 0.0, %v1741
      %v1743 = vpop.f32.mrb[0].mxu0
      %1744 = vmatprep.mubr.bf16.mxu0 0
      %1745 = vmatmul.mubr.bf16.gmra.mrb[0].mxu0 %v1402
      %v1746 = vpop.f32.mrb[0].mxu0
      %v1747 = vadd.f32 0.0, %v1746
      %v1748 = vpop.f32.mrb[0].mxu0
      %v1749 = vpop.f32.mrb[0].mxu0
      %v1750 = vadd.f32 0.0, %v1749
      %v1751 = vpop.f32.mrb[0].mxu0
      %1752 = vmatprep.mubr.bf16.mxu0 0
      %1753 = vmatmul.mubr.bf16.gmra.mrb[0].mxu0 %v1405
      %v1754 = vpop.f32.mrb[0].mxu0
      %v1755 = vadd.f32 0.0, %v1754
      %v1756 = vpop.f32.mrb[0].mxu0
      %v1757 = vpop.f32.mrb[0].mxu0
      %v1758 = vadd.f32 0.0, %v1757
      %v1759 = vpop.f32.mrb[0].mxu0
      %1760 = vmatprep.mubr.bf16.mxu0 0
      %1761 = vmatmul.mubr.bf16.gmra.mrb[0].mxu0 %v1408
      %v1762 = vpop.f32.mrb[0].mxu0
      %v1763 = vadd.f32 0.0, %v1762
      %v1764 = vpop.f32.mrb[0].mxu0
      %v1765 = vpop.f32.mrb[0].mxu0
      %v1766 = vadd.f32 0.0, %v1765
      %v1767 = vpop.f32.mrb[0].mxu0
      %1768 = vmatprep.mubr.bf16.mxu0 0
      %1769 = vmatmul.mubr.bf16.gmra.mrb[0].mxu0 %v1411
      %v1770 = vpop.f32.mrb[0].mxu0
      %v1771 = vadd.f32 0.0, %v1770
      %v1772 = vpop.f32.mrb[0].mxu0
      %v1773 = vpop.f32.mrb[0].mxu0
      %v1774 = vadd.f32 0.0, %v1773
      %v1775 = vpop.f32.mrb[0].mxu0
      %1776 = vmatprep.mubr.bf16.mxu0 0
      %1777 = vmatmul.mubr.bf16.gmra.mrb[0].mxu0 %v1414
      %v1778 = vpop.f32.mrb[0].mxu0
      %v1779 = vadd.f32 0.0, %v1778
      %v1780 = vpop.f32.mrb[0].mxu0
      %v1781 = vpop.f32.mrb[0].mxu0
      %v1782 = vadd.f32 0.0, %v1781
      %v1783 = vpop.f32.mrb[0].mxu0
      %1784 = vmatprep.mubr.bf16.mxu0 0
      %1785 = vmatmul.mubr.bf16.gmra.mrb[0].mxu0 %v1417
      %v1786 = vpop.f32.mrb[0].mxu0
      %v1787 = vadd.f32 0.0, %v1786
      %v1788 = vpop.f32.mrb[0].mxu0
      %v1789 = vpop.f32.mrb[0].mxu0
      %v1790 = vadd.f32 0.0, %v1789
      %v1791 = vpop.f32.mrb[0].mxu0
      %1792 = vmatprep.mubr.bf16.mxu0 0
      %1793 = vmatmul.mubr.bf16.gmra.mrb[0].mxu0 %v1420
      %v1794 = vpop.f32.mrb[0].mxu0
      %v1795 = vadd.f32 0.0, %v1794
      %v1796 = vpop.f32.mrb[0].mxu0
      %v1797 = vpop.f32.mrb[0].mxu0
      %v1798 = vadd.f32 0.0, %v1797
      %v1799 = vpop.f32.mrb[0].mxu0
      %1800 = vmatprep.mubr.bf16.mxu0 0
      %1801 = vmatmul.mubr.bf16.gmra.mrb[0].mxu0 %v1423
      %v1802 = vpop.f32.mrb[0].mxu0
      %v1803 = vadd.f32 0.0, %v1802
      %v1804 = vpop.f32.mrb[0].mxu0
      %v1805 = vpop.f32.mrb[0].mxu0
      %v1806 = vadd.f32 0.0, %v1805
      %v1807 = vpop.f32.mrb[0].mxu0
      %1808 = vmatprep.mubr.bf16.mxu0 0
      %1809 = vmatmul.mubr.bf16.gmra.mrb[0].mxu0 %v1651
      %v1810 = vpop.f32.mrb[0].mxu0
      %v1811 = vadd.f32 0.0, %v1810
      %v1812 = vpop.f32.mrb[0].mxu0
      %v1813 = vpop.f32.mrb[0].mxu0
      %v1814 = vadd.f32 0.0, %v1813
      %v1815 = vpop.f32.mrb[0].mxu0
      %1816 = vdwg.mxu0
      %v1817 = vadd.f32 %v1589, %v1691
      %v1818 = vadd.f32 %v1590, %v1694
      %v1819 = vadd.f32 %v1591, %v1699
      %v1820 = vadd.f32 %v1592, %v1702
      %v1821 = vadd.f32 %v1593, %v1707
      %v1822 = vadd.f32 %v1594, %v1710
      %v1823 = vadd.f32 %v1595, %v1715
      %v1824 = vadd.f32 %v1596, %v1718
      %v1825 = vadd.f32 %v1597, %v1723
      %v1826 = vadd.f32 %v1598, %v1726
      %v1827 = vadd.f32 %v1599, %v1731
      %v1828 = vadd.f32 %v1600, %v1734
      %v1829 = vadd.f32 %v1601, %v1739
      %v1830 = vadd.f32 %v1602, %v1742
      %v1831 = vadd.f32 %v1603, %v1747
      %v1832 = vadd.f32 %v1604, %v1750
      %v1833 = vadd.f32 %v1605, %v1755
      %v1834 = vadd.f32 %v1606, %v1758
      %v1835 = vadd.f32 %v1607, %v1763
      %v1836 = vadd.f32 %v1608, %v1766
      %v1837 = vadd.f32 %v1609, %v1771
      %v1838 = vadd.f32 %v1610, %v1774
      %v1839 = vadd.f32 %v1611, %v1779
      %v1840 = vadd.f32 %v1612, %v1782
      %v1841 = vadd.f32 %v1613, %v1787
      %v1842 = vadd.f32 %v1614, %v1790
      %v1843 = vadd.f32 %v1615, %v1795
      %v1844 = vadd.f32 %v1616, %v1798
      %v1845 = vadd.f32 %v1617, %v1803
      %v1846 = vadd.f32 %v1618, %v1806
      %v1847 = vadd.f32 %v1619, %v1811
      %v1848 = vadd.f32 %v1620, %v1814
      %v1850 = vshrl.u32 %v259, 16
      %v1852 = vrot.slane %v1850, 4
      %v1853 = vshll.u32 %v259, 16
      %v1855 = vrot.slane %v1853, 5
      %v1856 = vor.u32 %v1852, %v1855
      %v1857 = vrot.slane %v1856, 4
      %v1859 = vshll.u32 %v260, 16
      %v1861 = vrot.slane %v1859, 5
      %v1862 = vsel %vm942, %v1857, %v1861
      %v1863 = vshrl.u32 %v260, 16
      %v1865 = vrot.slane %v1863, 4
      %v1866 = vor.u32 %v1865, %v1861
      %v1867 = vrot.slane %v1866, 4
      %v1869 = vshll.u32 %v261, 16
      %v1871 = vrot.slane %v1869, 5
      %v1872 = vsel %vm942, %v1867, %v1871
      %s1873 = scalar_lea.vmem %s1, 14
      %v1874 = vld [vmem:[%s1873] sm:$0x3]
      %v1875 = vunpack.c.l.b16 %v1862
      %v1876 = vunpack.c.l.b16 %v1872
      %v1877 = vpack.c.b16 %v1876, %v1875
      %v1879 = vsel %vm345, %v1877, 0
      %v1882 = vand.u32 %v1874, %v397
      %1884 = vmatprep.subr.bf16.mxu0 0
      %1885 = vmatpush1.bf16.msra.mxu0 %v1882
      %1886 = vmatprep.subr.bf16.mxu0 0
      %1887 = vmatpush1.bf16.msra.mxu0 0
      %1888 = vmatprep.subr.bf16.mxu0 0
      %1889 = vmatpush1.bf16.msra.mxu0 0
      %1890 = vmatprep.subr.bf16.mxu0 0
      %1891 = vmatpush1.bf16.msra.mxu0 0
      %1892 = vmatprep.subr.bf16.mxu0 0
      %1893 = vmatpush1.bf16.msra.mxu0 0
      %1894 = vmatprep.subr.bf16.mxu0 0
      %1895 = vmatpush1.bf16.msra.mxu0 0
      %1896 = vmatprep.subr.bf16.mxu0 0
      %1897 = vmatpush1.bf16.msra.mxu0 0
      %1898 = vmatprep.subr.bf16.mxu0 0
      %1899 = vmatpush1.bf16.msra.mxu0 0
      %1900 = vmatprep.subr.bf16.mxu0 0
      %1901 = vmatpush1.bf16.msra.mxu0 0
      %1902 = vmatprep.subr.bf16.mxu0 0
      %1903 = vmatpush1.bf16.msra.mxu0 0
      %1904 = vmatprep.subr.bf16.mxu0 0
      %1905 = vmatpush1.bf16.msra.mxu0 0
      %1906 = vmatprep.subr.bf16.mxu0 0
      %1907 = vmatpush1.bf16.msra.mxu0 0
      %1908 = vmatprep.subr.bf16.mxu0 0
      %1909 = vmatpush1.bf16.msra.mxu0 0
      %1910 = vmatprep.subr.bf16.mxu0 0
      %1911 = vmatpush1.bf16.msra.mxu0 0
      %1912 = vmatprep.subr.bf16.mxu0 0
      %1913 = vmatpush1.bf16.msra.mxu0 0
      %1914 = vmatprep.subr.bf16.mxu0 0
      %1915 = vmatpush1.bf16.msra.mxu0 0
      %1916 = vmatprep.mubr.bf16.mxu0 0
      %1917 = vmatmul.mubr.bf16.gmra.mrb[0].mxu0 %v1384
      %v1918 = vpop.f32.mrb[0].mxu0
      %v1919 = vadd.f32 0.0, %v1918
      %v1920 = vpop.f32.mrb[0].mxu0
      %v1921 = vpop.f32.mrb[0].mxu0
      %v1922 = vadd.f32 0.0, %v1921
      %v1923 = vpop.f32.mrb[0].mxu0
      %1924 = vmatprep.mubr.bf16.mxu0 0
      %1925 = vmatmul.mubr.bf16.gmra.mrb[0].mxu0 %v1387
      %v1926 = vpop.f32.mrb[0].mxu0
      %v1927 = vadd.f32 0.0, %v1926
      %v1928 = vpop.f32.mrb[0].mxu0
      %v1929 = vpop.f32.mrb[0].mxu0
      %v1930 = vadd.f32 0.0, %v1929
      %v1931 = vpop.f32.mrb[0].mxu0
      %1932 = vmatprep.mubr.bf16.mxu0 0
      %1933 = vmatmul.mubr.bf16.gmra.mrb[0].mxu0 %v1390
      %v1934 = vpop.f32.mrb[0].mxu0
      %v1935 = vadd.f32 0.0, %v1934
      %v1936 = vpop.f32.mrb[0].mxu0
      %v1937 = vpop.f32.mrb[0].mxu0
      %v1938 = vadd.f32 0.0, %v1937
      %v1939 = vpop.f32.mrb[0].mxu0
      %1940 = vmatprep.mubr.bf16.mxu0 0
      %1941 = vmatmul.mubr.bf16.gmra.mrb[0].mxu0 %v1393
      %v1942 = vpop.f32.mrb[0].mxu0
      %v1943 = vadd.f32 0.0, %v1942
      %v1944 = vpop.f32.mrb[0].mxu0
      %v1945 = vpop.f32.mrb[0].mxu0
      %v1946 = vadd.f32 0.0, %v1945
      %v1947 = vpop.f32.mrb[0].mxu0
      %1948 = vmatprep.mubr.bf16.mxu0 0
      %1949 = vmatmul.mubr.bf16.gmra.mrb[0].mxu0 %v1396
      %v1950 = vpop.f32.mrb[0].mxu0
      %v1951 = vadd.f32 0.0, %v1950
      %v1952 = vpop.f32.mrb[0].mxu0
      %v1953 = vpop.f32.mrb[0].mxu0
      %v1954 = vadd.f32 0.0, %v1953
      %v1955 = vpop.f32.mrb[0].mxu0
      %1956 = vmatprep.mubr.bf16.mxu0 0
      %1957 = vmatmul.mubr.bf16.gmra.mrb[0].mxu0 %v1399
      %v1958 = vpop.f32.mrb[0].mxu0
      %v1959 = vadd.f32 0.0, %v1958
      %v1960 = vpop.f32.mrb[0].mxu0
      %v1961 = vpop.f32.mrb[0].mxu0
      %v1962 = vadd.f32 0.0, %v1961
      %v1963 = vpop.f32.mrb[0].mxu0
      %1964 = vmatprep.mubr.bf16.mxu0 0
      %1965 = vmatmul.mubr.bf16.gmra.mrb[0].mxu0 %v1402
      %v1966 = vpop.f32.mrb[0].mxu0
      %v1967 = vadd.f32 0.0, %v1966
      %v1968 = vpop.f32.mrb[0].mxu0
      %v1969 = vpop.f32.mrb[0].mxu0
      %v1970 = vadd.f32 0.0, %v1969
      %v1971 = vpop.f32.mrb[0].mxu0
      %1972 = vmatprep.mubr.bf16.mxu0 0
      %1973 = vmatmul.mubr.bf16.gmra.mrb[0].mxu0 %v1405
      %v1974 = vpop.f32.mrb[0].mxu0
      %v1975 = vadd.f32 0.0, %v1974
      %v1976 = vpop.f32.mrb[0].mxu0
      %v1977 = vpop.f32.mrb[0].mxu0
      %v1978 = vadd.f32 0.0, %v1977
      %v1979 = vpop.f32.mrb[0].mxu0
      %1980 = vmatprep.mubr.bf16.mxu0 0
      %1981 = vmatmul.mubr.bf16.gmra.mrb[0].mxu0 %v1408
      %v1982 = vpop.f32.mrb[0].mxu0
      %v1983 = vadd.f32 0.0, %v1982
      %v1984 = vpop.f32.mrb[0].mxu0
      %v1985 = vpop.f32.mrb[0].mxu0
      %v1986 = vadd.f32 0.0, %v1985
      %v1987 = vpop.f32.mrb[0].mxu0
      %1988 = vmatprep.mubr.bf16.mxu0 0
      %1989 = vmatmul.mubr.bf16.gmra.mrb[0].mxu0 %v1411
      %v1990 = vpop.f32.mrb[0].mxu0
      %v1991 = vadd.f32 0.0, %v1990
      %v1992 = vpop.f32.mrb[0].mxu0
      %v1993 = vpop.f32.mrb[0].mxu0
      %v1994 = vadd.f32 0.0, %v1993
      %v1995 = vpop.f32.mrb[0].mxu0
      %1996 = vmatprep.mubr.bf16.mxu0 0
      %1997 = vmatmul.mubr.bf16.gmra.mrb[0].mxu0 %v1414
      %v1998 = vpop.f32.mrb[0].mxu0
      %v1999 = vadd.f32 0.0, %v1998
      %v2000 = vpop.f32.mrb[0].mxu0
      %v2001 = vpop.f32.mrb[0].mxu0
      %v2002 = vadd.f32 0.0, %v2001
      %v2003 = vpop.f32.mrb[0].mxu0
      %2004 = vmatprep.mubr.bf16.mxu0 0
      %2005 = vmatmul.mubr.bf16.gmra.mrb[0].mxu0 %v1417
      %v2006 = vpop.f32.mrb[0].mxu0
      %v2007 = vadd.f32 0.0, %v2006
      %v2008 = vpop.f32.mrb[0].mxu0
      %v2009 = vpop.f32.mrb[0].mxu0
      %v2010 = vadd.f32 0.0, %v2009
      %v2011 = vpop.f32.mrb[0].mxu0
      %2012 = vmatprep.mubr.bf16.mxu0 0
      %2013 = vmatmul.mubr.bf16.gmra.mrb[0].mxu0 %v1420
      %v2014 = vpop.f32.mrb[0].mxu0
      %v2015 = vadd.f32 0.0, %v2014
      %v2016 = vpop.f32.mrb[0].mxu0
      %v2017 = vpop.f32.mrb[0].mxu0
      %v2018 = vadd.f32 0.0, %v2017
      %v2019 = vpop.f32.mrb[0].mxu0
      %2020 = vmatprep.mubr.bf16.mxu0 0
      %2021 = vmatmul.mubr.bf16.gmra.mrb[0].mxu0 %v1423
      %v2022 = vpop.f32.mrb[0].mxu0
      %v2023 = vadd.f32 0.0, %v2022
      %v2024 = vpop.f32.mrb[0].mxu0
      %v2025 = vpop.f32.mrb[0].mxu0
      %v2026 = vadd.f32 0.0, %v2025
      %v2027 = vpop.f32.mrb[0].mxu0
      %2028 = vmatprep.mubr.bf16.mxu0 0
      %2029 = vmatmul.mubr.bf16.gmra.mrb[0].mxu0 %v1651
      %v2030 = vpop.f32.mrb[0].mxu0
      %v2031 = vadd.f32 0.0, %v2030
      %v2032 = vpop.f32.mrb[0].mxu0
      %v2033 = vpop.f32.mrb[0].mxu0
      %v2034 = vadd.f32 0.0, %v2033
      %v2035 = vpop.f32.mrb[0].mxu0
      %2036 = vmatprep.mubr.bf16.mxu0 0
      %2037 = vmatmul.mubr.bf16.gmra.mrb[0].mxu0 %v1879
      %v2038 = vpop.f32.mrb[0].mxu0
      %v2039 = vadd.f32 0.0, %v2038
      %v2040 = vpop.f32.mrb[0].mxu0
      %v2041 = vpop.f32.mrb[0].mxu0
      %v2042 = vadd.f32 0.0, %v2041
      %v2043 = vpop.f32.mrb[0].mxu0
      %2044 = vdwg.mxu0
      %v2045 = vadd.f32 %v1817, %v1919
      %v2046 = vadd.f32 %v1818, %v1922
      %v2047 = vadd.f32 %v1819, %v1927
      %v2048 = vadd.f32 %v1820, %v1930
      %v2049 = vadd.f32 %v1821, %v1935
      %v2050 = vadd.f32 %v1822, %v1938
      %v2051 = vadd.f32 %v1823, %v1943
      %v2052 = vadd.f32 %v1824, %v1946
      %v2053 = vadd.f32 %v1825, %v1951
      %v2054 = vadd.f32 %v1826, %v1954
      %v2055 = vadd.f32 %v1827, %v1959
      %v2056 = vadd.f32 %v1828, %v1962
      %v2057 = vadd.f32 %v1829, %v1967
      %v2058 = vadd.f32 %v1830, %v1970
      %v2059 = vadd.f32 %v1831, %v1975
      %v2060 = vadd.f32 %v1832, %v1978
      %v2061 = vadd.f32 %v1833, %v1983
      %v2062 = vadd.f32 %v1834, %v1986
      %v2063 = vadd.f32 %v1835, %v1991
      %v2064 = vadd.f32 %v1836, %v1994
      %v2065 = vadd.f32 %v1837, %v1999
      %v2066 = vadd.f32 %v1838, %v2002
      %v2067 = vadd.f32 %v1839, %v2007
      %v2068 = vadd.f32 %v1840, %v2010
      %v2069 = vadd.f32 %v1841, %v2015
      %v2070 = vadd.f32 %v1842, %v2018
      %v2071 = vadd.f32 %v1843, %v2023
      %v2072 = vadd.f32 %v1844, %v2026
      %v2073 = vadd.f32 %v1845, %v2031
      %v2074 = vadd.f32 %v1846, %v2034
      %v2075 = vadd.f32 %v1847, %v2039
      %v2076 = vadd.f32 %v1848, %v2042
      %vm2093 = vcmask 1042432
      %vm2094 = vcmask 1046532
      %vm2095 = vmor %vm2093, %vm2094
      %v2096 = vrot.slane %v208, 5
      %v2097 = vrot.slane %v2096, 4
      %v2098 = vrot.slane %v209, 5
      %v2099 = vsel %vm2095, %v2097, %v2098
      %v2100 = vrot.slane %v2098, 4
      %v2101 = vrot.slane %v210, 5
      %v2102 = vsel %vm2095, %v2100, %v2101
      %v2103 = vrot.slane %v211, 5
      %v2104 = vrot.slane %v2103, 4
      %v2105 = vrot.slane %v212, 5
      %v2106 = vsel %vm2095, %v2104, %v2105
      %v2107 = vrot.slane %v2105, 4
      %v2108 = vrot.slane %v213, 5
      %v2109 = vsel %vm2095, %v2107, %v2108
      %v2110 = vrot.slane %v214, 5
      %v2111 = vrot.slane %v2110, 4
      %v2112 = vrot.slane %v215, 5
      %v2113 = vsel %vm2095, %v2111, %v2112
      %v2114 = vrot.slane %v2112, 4
      %v2115 = vrot.slane %v216, 5
      %v2116 = vsel %vm2095, %v2114, %v2115
      %v2117 = vrot.slane %v217, 5
      %v2118 = vrot.slane %v2117, 4
      %v2119 = vrot.slane %v218, 5
      %v2120 = vsel %vm2095, %v2118, %v2119
      %v2121 = vrot.slane %v2119, 4
      %v2122 = vrot.slane %v219, 5
      %v2123 = vsel %vm2095, %v2121, %v2122
      %v2124 = vrot.slane %v220, 5
      %v2125 = vrot.slane %v2124, 4
      %v2126 = vrot.slane %v221, 5
      %v2127 = vsel %vm2095, %v2125, %v2126
      %v2128 = vrot.slane %v2126, 4
      %v2129 = vrot.slane %v222, 5
      %v2130 = vsel %vm2095, %v2128, %v2129
      %v2131 = vrot.slane %v223, 5
      %v2132 = vrot.slane %v2131, 4
      %v2133 = vrot.slane %v224, 5
      %v2134 = vsel %vm2095, %v2132, %v2133
      %v2135 = vrot.slane %v2133, 4
      %v2136 = vrot.slane %v225, 5
      %v2137 = vsel %vm2095, %v2135, %v2136
      %v2138 = vrot.slane %v226, 5
      %v2139 = vrot.slane %v2138, 4
      %v2140 = vrot.slane %v227, 5
      %v2141 = vsel %vm2095, %v2139, %v2140
      %v2142 = vrot.slane %v2140, 4
      %v2143 = vrot.slane %v228, 5
      %v2144 = vsel %vm2095, %v2142, %v2143
      %v2145 = vrot.slane %v229, 5
      %v2146 = vrot.slane %v2145, 4
      %v2147 = vrot.slane %v230, 5
      %v2148 = vsel %vm2095, %v2146, %v2147
      %v2149 = vrot.slane %v2147, 4
      %v2150 = vrot.slane %v231, 5
      %v2151 = vsel %vm2095, %v2149, %v2150
      %v2152 = vrot.slane %v232, 5
      %v2153 = vrot.slane %v2152, 4
      %v2154 = vrot.slane %v233, 5
      %v2155 = vsel %vm2095, %v2153, %v2154
      %v2156 = vrot.slane %v2154, 4
      %v2157 = vrot.slane %v234, 5
      %v2158 = vsel %vm2095, %v2156, %v2157
      %v2159 = vrot.slane %v235, 5
      %v2160 = vrot.slane %v2159, 4
      %v2161 = vrot.slane %v236, 5
      %v2162 = vsel %vm2095, %v2160, %v2161
      %v2163 = vrot.slane %v2161, 4
      %v2164 = vrot.slane %v237, 5
      %v2165 = vsel %vm2095, %v2163, %v2164
      %v2166 = vrot.slane %v238, 5
      %v2167 = vrot.slane %v2166, 4
      %v2168 = vrot.slane %v239, 5
      %v2169 = vsel %vm2095, %v2167, %v2168
      %v2170 = vrot.slane %v2168, 4
      %v2171 = vrot.slane %v240, 5
      %v2172 = vsel %vm2095, %v2170, %v2171
      %v2173 = vrot.slane %v241, 5
      %v2174 = vrot.slane %v2173, 4
      %v2175 = vrot.slane %v242, 5
      %v2176 = vsel %vm2095, %v2174, %v2175
      %v2177 = vrot.slane %v2175, 4
      %v2178 = vrot.slane %v243, 5
      %v2179 = vsel %vm2095, %v2177, %v2178
      %v2180 = vrot.slane %v244, 5
      %v2181 = vrot.slane %v2180, 4
      %v2182 = vrot.slane %v245, 5
      %v2183 = vsel %vm2095, %v2181, %v2182
      %v2184 = vrot.slane %v2182, 4
      %v2185 = vrot.slane %v246, 5
      %v2186 = vsel %vm2095, %v2184, %v2185
      %v2187 = vrot.slane %v247, 5
      %v2188 = vrot.slane %v2187, 4
      %v2189 = vrot.slane %v248, 5
      %v2190 = vsel %vm2095, %v2188, %v2189
      %v2191 = vrot.slane %v2189, 4
      %v2192 = vrot.slane %v249, 5
      %v2193 = vsel %vm2095, %v2191, %v2192
      %v2194 = vrot.slane %v250, 5
      %v2195 = vrot.slane %v2194, 4
      %v2196 = vrot.slane %v251, 5
      %v2197 = vsel %vm2095, %v2195, %v2196
      %v2198 = vrot.slane %v2196, 4
      %v2199 = vrot.slane %v252, 5
      %v2200 = vsel %vm2095, %v2198, %v2199
      %v2201 = vrot.slane %v253, 5
      %v2202 = vrot.slane %v2201, 4
      %v2203 = vrot.slane %v254, 5
      %v2204 = vsel %vm2095, %v2202, %v2203
      %v2205 = vrot.slane %v2203, 4
      %v2206 = vrot.slane %v255, 5
      %v2207 = vsel %vm2095, %v2205, %v2206
      %s2208 = scalar_lea.vmem %s1, 4
      %v2209 = vld [vmem:[%s2208] sm:$0x3]
      %v2210 = vunpack.c.l.b16 %v2099
      %v2211 = vunpack.c.l.b16 %v2102
      %v2212 = vunpack.c.l.b16 %v2106
      %v2213 = vunpack.c.l.b16 %v2109
      %v2214 = vunpack.c.l.b16 %v2113
      %v2215 = vunpack.c.l.b16 %v2116
      %v2216 = vunpack.c.l.b16 %v2120
      %v2217 = vunpack.c.l.b16 %v2123
      %v2218 = vunpack.c.l.b16 %v2127
      %v2219 = vunpack.c.l.b16 %v2130
      %v2220 = vunpack.c.l.b16 %v2134
      %v2221 = vunpack.c.l.b16 %v2137
      %v2222 = vunpack.c.l.b16 %v2141
      %v2223 = vunpack.c.l.b16 %v2144
      %v2224 = vunpack.c.l.b16 %v2148
      %v2225 = vunpack.c.l.b16 %v2151
      %v2226 = vunpack.c.l.b16 %v2155
      %v2227 = vunpack.c.l.b16 %v2158
      %v2228 = vunpack.c.l.b16 %v2162
      %v2229 = vunpack.c.l.b16 %v2165
      %v2230 = vunpack.c.l.b16 %v2169
      %v2231 = vunpack.c.l.b16 %v2172
      %v2232 = vunpack.c.l.b16 %v2176
      %v2233 = vunpack.c.l.b16 %v2179
      %v2234 = vunpack.c.l.b16 %v2183
      %v2235 = vunpack.c.l.b16 %v2186
      %v2236 = vunpack.c.l.b16 %v2190
      %v2237 = vunpack.c.l.b16 %v2193
      %v2238 = vunpack.c.l.b16 %v2197
      %v2239 = vunpack.c.l.b16 %v2200
      %v2240 = vunpack.c.l.b16 %v2204
      %v2241 = vunpack.c.l.b16 %v2207
      %v2242 = vpack.c.b16 %v2211, %v2210
      %v2243 = vpack.c.b16 %v2213, %v2212
      %v2244 = vpack.c.b16 %v2215, %v2214
      %v2245 = vpack.c.b16 %v2217, %v2216
      %v2246 = vpack.c.b16 %v2219, %v2218
      %v2247 = vpack.c.b16 %v2221, %v2220
      %v2248 = vpack.c.b16 %v2223, %v2222
      %v2249 = vpack.c.b16 %v2225, %v2224
      %v2250 = vpack.c.b16 %v2227, %v2226
      %v2251 = vpack.c.b16 %v2229, %v2228
      %v2252 = vpack.c.b16 %v2231, %v2230
      %v2253 = vpack.c.b16 %v2233, %v2232
      %v2254 = vpack.c.b16 %v2235, %v2234
      %v2255 = vpack.c.b16 %v2237, %v2236
      %v2256 = vpack.c.b16 %v2239, %v2238
      %v2257 = vpack.c.b16 %v2241, %v2240
      %v2259 = vsel %vm345, %v2242, 0
      %v2262 = vsel %vm345, %v2243, 0
      %v2265 = vsel %vm345, %v2244, 0
      %v2268 = vsel %vm345, %v2245, 0
      %v2271 = vsel %vm345, %v2246, 0
      %v2274 = vsel %vm345, %v2247, 0
      %v2277 = vsel %vm345, %v2248, 0
      %v2280 = vsel %vm345, %v2249, 0
      %v2283 = vsel %vm345, %v2250, 0
      %v2286 = vsel %vm345, %v2251, 0
      %v2289 = vsel %vm345, %v2252, 0
      %v2292 = vsel %vm345, %v2253, 0
      %v2295 = vsel %vm345, %v2254, 0
      %v2298 = vsel %vm345, %v2255, 0
      %v2301 = vsel %vm345, %v2256, 0
      %v2304 = vsel %vm345, %v2257, 0
      %v2307 = vand.u32 %v2209, %v397
      %2309 = vmatprep.subr.bf16.mxu0 0
      %2310 = vmatpush1.bf16.msra.mxu0 %v2307
      %2311 = vmatprep.subr.bf16.mxu0 0
      %2312 = vmatpush1.bf16.msra.mxu0 0
      %2313 = vmatprep.subr.bf16.mxu0 0
      %2314 = vmatpush1.bf16.msra.mxu0 0
      %2315 = vmatprep.subr.bf16.mxu0 0
      %2316 = vmatpush1.bf16.msra.mxu0 0
      %2317 = vmatprep.subr.bf16.mxu0 0
      %2318 = vmatpush1.bf16.msra.mxu0 0
      %2319 = vmatprep.subr.bf16.mxu0 0
      %2320 = vmatpush1.bf16.msra.mxu0 0
      %2321 = vmatprep.subr.bf16.mxu0 0
      %2322 = vmatpush1.bf16.msra.mxu0 0
      %2323 = vmatprep.subr.bf16.mxu0 0
      %2324 = vmatpush1.bf16.msra.mxu0 0
      %2325 = vmatprep.subr.bf16.mxu0 0
      %2326 = vmatpush1.bf16.msra.mxu0 0
      %2327 = vmatprep.subr.bf16.mxu0 0
      %2328 = vmatpush1.bf16.msra.mxu0 0
      %2329 = vmatprep.subr.bf16.mxu0 0
      %2330 = vmatpush1.bf16.msra.mxu0 0
      %2331 = vmatprep.subr.bf16.mxu0 0
      %2332 = vmatpush1.bf16.msra.mxu0 0
      %2333 = vmatprep.subr.bf16.mxu0 0
      %2334 = vmatpush1.bf16.msra.mxu0 0
      %2335 = vmatprep.subr.bf16.mxu0 0
      %2336 = vmatpush1.bf16.msra.mxu0 0
      %2337 = vmatprep.subr.bf16.mxu0 0
      %2338 = vmatpush1.bf16.msra.mxu0 0
      %2339 = vmatprep.subr.bf16.mxu0 0
      %2340 = vmatpush1.bf16.msra.mxu0 0
      %2341 = vmatprep.mubr.bf16.mxu0 0
      %2342 = vmatmul.mubr.bf16.gmra.mrb[0].mxu0 %v2259
      %v2343 = vpop.f32.mrb[0].mxu0
      %v2344 = vadd.f32 0.0, %v2343
      %v2345 = vpop.f32.mrb[0].mxu0
      %v2346 = vpop.f32.mrb[0].mxu0
      %v2347 = vadd.f32 0.0, %v2346
      %v2348 = vpop.f32.mrb[0].mxu0
      %2349 = vmatprep.mubr.bf16.mxu0 0
      %2350 = vmatmul.mubr.bf16.gmra.mrb[0].mxu0 %v2262
      %v2351 = vpop.f32.mrb[0].mxu0
      %v2352 = vadd.f32 0.0, %v2351
      %v2353 = vpop.f32.mrb[0].mxu0
      %v2354 = vpop.f32.mrb[0].mxu0
      %v2355 = vadd.f32 0.0, %v2354
      %v2356 = vpop.f32.mrb[0].mxu0
      %2357 = vmatprep.mubr.bf16.mxu0 0
      %2358 = vmatmul.mubr.bf16.gmra.mrb[0].mxu0 %v2265
      %v2359 = vpop.f32.mrb[0].mxu0
      %v2360 = vadd.f32 0.0, %v2359
      %v2361 = vpop.f32.mrb[0].mxu0
      %v2362 = vpop.f32.mrb[0].mxu0
      %v2363 = vadd.f32 0.0, %v2362
      %v2364 = vpop.f32.mrb[0].mxu0
      %2365 = vmatprep.mubr.bf16.mxu0 0
      %2366 = vmatmul.mubr.bf16.gmra.mrb[0].mxu0 %v2268
      %v2367 = vpop.f32.mrb[0].mxu0
      %v2368 = vadd.f32 0.0, %v2367
      %v2369 = vpop.f32.mrb[0].mxu0
      %v2370 = vpop.f32.mrb[0].mxu0
      %v2371 = vadd.f32 0.0, %v2370
      %v2372 = vpop.f32.mrb[0].mxu0
      %2373 = vmatprep.mubr.bf16.mxu0 0
      %2374 = vmatmul.mubr.bf16.gmra.mrb[0].mxu0 %v2271
      %v2375 = vpop.f32.mrb[0].mxu0
      %v2376 = vadd.f32 0.0, %v2375
      %v2377 = vpop.f32.mrb[0].mxu0
      %v2378 = vpop.f32.mrb[0].mxu0
      %v2379 = vadd.f32 0.0, %v2378
      %v2380 = vpop.f32.mrb[0].mxu0
      %2381 = vmatprep.mubr.bf16.mxu0 0
      %2382 = vmatmul.mubr.bf16.gmra.mrb[0].mxu0 %v2274
      %v2383 = vpop.f32.mrb[0].mxu0
      %v2384 = vadd.f32 0.0, %v2383
      %v2385 = vpop.f32.mrb[0].mxu0
      %v2386 = vpop.f32.mrb[0].mxu0
      %v2387 = vadd.f32 0.0, %v2386
      %v2388 = vpop.f32.mrb[0].mxu0
      %2389 = vmatprep.mubr.bf16.mxu0 0
      %2390 = vmatmul.mubr.bf16.gmra.mrb[0].mxu0 %v2277
      %v2391 = vpop.f32.mrb[0].mxu0
      %v2392 = vadd.f32 0.0, %v2391
      %v2393 = vpop.f32.mrb[0].mxu0
      %v2394 = vpop.f32.mrb[0].mxu0
      %v2395 = vadd.f32 0.0, %v2394
      %v2396 = vpop.f32.mrb[0].mxu0
      %2397 = vmatprep.mubr.bf16.mxu0 0
      %2398 = vmatmul.mubr.bf16.gmra.mrb[0].mxu0 %v2280
      %v2399 = vpop.f32.mrb[0].mxu0
      %v2400 = vadd.f32 0.0, %v2399
      %v2401 = vpop.f32.mrb[0].mxu0
      %v2402 = vpop.f32.mrb[0].mxu0
      %v2403 = vadd.f32 0.0, %v2402
      %v2404 = vpop.f32.mrb[0].mxu0
      %2405 = vmatprep.mubr.bf16.mxu0 0
      %2406 = vmatmul.mubr.bf16.gmra.mrb[0].mxu0 %v2283
      %v2407 = vpop.f32.mrb[0].mxu0
      %v2408 = vadd.f32 0.0, %v2407
      %v2409 = vpop.f32.mrb[0].mxu0
      %v2410 = vpop.f32.mrb[0].mxu0
      %v2411 = vadd.f32 0.0, %v2410
      %v2412 = vpop.f32.mrb[0].mxu0
      %2413 = vmatprep.mubr.bf16.mxu0 0
      %2414 = vmatmul.mubr.bf16.gmra.mrb[0].mxu0 %v2286
      %v2415 = vpop.f32.mrb[0].mxu0
      %v2416 = vadd.f32 0.0, %v2415
      %v2417 = vpop.f32.mrb[0].mxu0
      %v2418 = vpop.f32.mrb[0].mxu0
      %v2419 = vadd.f32 0.0, %v2418
      %v2420 = vpop.f32.mrb[0].mxu0
      %2421 = vmatprep.mubr.bf16.mxu0 0
      %2422 = vmatmul.mubr.bf16.gmra.mrb[0].mxu0 %v2289
      %v2423 = vpop.f32.mrb[0].mxu0
      %v2424 = vadd.f32 0.0, %v2423
      %v2425 = vpop.f32.mrb[0].mxu0
      %v2426 = vpop.f32.mrb[0].mxu0
      %v2427 = vadd.f32 0.0, %v2426
      %v2428 = vpop.f32.mrb[0].mxu0
      %2429 = vmatprep.mubr.bf16.mxu0 0
      %2430 = vmatmul.mubr.bf16.gmra.mrb[0].mxu0 %v2292
      %v2431 = vpop.f32.mrb[0].mxu0
      %v2432 = vadd.f32 0.0, %v2431
      %v2433 = vpop.f32.mrb[0].mxu0
      %v2434 = vpop.f32.mrb[0].mxu0
      %v2435 = vadd.f32 0.0, %v2434
      %v2436 = vpop.f32.mrb[0].mxu0
      %2437 = vmatprep.mubr.bf16.mxu0 0
      %2438 = vmatmul.mubr.bf16.gmra.mrb[0].mxu0 %v2295
      %v2439 = vpop.f32.mrb[0].mxu0
      %v2440 = vadd.f32 0.0, %v2439
      %v2441 = vpop.f32.mrb[0].mxu0
      %v2442 = vpop.f32.mrb[0].mxu0
      %v2443 = vadd.f32 0.0, %v2442
      %v2444 = vpop.f32.mrb[0].mxu0
      %2445 = vmatprep.mubr.bf16.mxu0 0
      %2446 = vmatmul.mubr.bf16.gmra.mrb[0].mxu0 %v2298
      %v2447 = vpop.f32.mrb[0].mxu0
      %v2448 = vadd.f32 0.0, %v2447
      %v2449 = vpop.f32.mrb[0].mxu0
      %v2450 = vpop.f32.mrb[0].mxu0
      %v2451 = vadd.f32 0.0, %v2450
      %v2452 = vpop.f32.mrb[0].mxu0
      %2453 = vmatprep.mubr.bf16.mxu0 0
      %2454 = vmatmul.mubr.bf16.gmra.mrb[0].mxu0 %v2301
      %v2455 = vpop.f32.mrb[0].mxu0
      %v2456 = vadd.f32 0.0, %v2455
      %v2457 = vpop.f32.mrb[0].mxu0
      %v2458 = vpop.f32.mrb[0].mxu0
      %v2459 = vadd.f32 0.0, %v2458
      %v2460 = vpop.f32.mrb[0].mxu0
      %2461 = vmatprep.mubr.bf16.mxu0 0
      %2462 = vmatmul.mubr.bf16.gmra.mrb[0].mxu0 %v2304
      %v2463 = vpop.f32.mrb[0].mxu0
      %v2464 = vadd.f32 0.0, %v2463
      %v2465 = vpop.f32.mrb[0].mxu0
      %v2466 = vpop.f32.mrb[0].mxu0
      %v2467 = vadd.f32 0.0, %v2466
      %v2468 = vpop.f32.mrb[0].mxu0
      %2469 = vdwg.mxu0
      %v2470 = vadd.f32 %v2045, %v2344
      %v2471 = vadd.f32 %v2046, %v2347
      %v2472 = vadd.f32 %v2047, %v2352
      %v2473 = vadd.f32 %v2048, %v2355
      %v2474 = vadd.f32 %v2049, %v2360
      %v2475 = vadd.f32 %v2050, %v2363
      %v2476 = vadd.f32 %v2051, %v2368
      %v2477 = vadd.f32 %v2052, %v2371
      %v2478 = vadd.f32 %v2053, %v2376
      %v2479 = vadd.f32 %v2054, %v2379
      %v2480 = vadd.f32 %v2055, %v2384
      %v2481 = vadd.f32 %v2056, %v2387
      %v2482 = vadd.f32 %v2057, %v2392
      %v2483 = vadd.f32 %v2058, %v2395
      %v2484 = vadd.f32 %v2059, %v2400
      %v2485 = vadd.f32 %v2060, %v2403
      %v2486 = vadd.f32 %v2061, %v2408
      %v2487 = vadd.f32 %v2062, %v2411
      %v2488 = vadd.f32 %v2063, %v2416
      %v2489 = vadd.f32 %v2064, %v2419
      %v2490 = vadd.f32 %v2065, %v2424
      %v2491 = vadd.f32 %v2066, %v2427
      %v2492 = vadd.f32 %v2067, %v2432
      %v2493 = vadd.f32 %v2068, %v2435
      %v2494 = vadd.f32 %v2069, %v2440
      %v2495 = vadd.f32 %v2070, %v2443
      %v2496 = vadd.f32 %v2071, %v2448
      %v2497 = vadd.f32 %v2072, %v2451
      %v2498 = vadd.f32 %v2073, %v2456
      %v2499 = vadd.f32 %v2074, %v2459
      %v2500 = vadd.f32 %v2075, %v2464
      %v2501 = vadd.f32 %v2076, %v2467
      %v2503 = vrot.slane %v256, 5
      %v2504 = vrot.slane %v2503, 4
      %v2505 = vrot.slane %v257, 5
      %v2506 = vsel %vm2095, %v2504, %v2505
      %v2507 = vrot.slane %v2505, 4
      %v2508 = vrot.slane %v258, 5
      %v2509 = vsel %vm2095, %v2507, %v2508
      %s2510 = scalar_lea.vmem %s1, 10
      %v2511 = vld [vmem:[%s2510] sm:$0x3]
      %v2512 = vunpack.c.l.b16 %v2506
      %v2513 = vunpack.c.l.b16 %v2509
      %v2514 = vpack.c.b16 %v2513, %v2512
      %v2516 = vsel %vm345, %v2514, 0
      %v2519 = vand.u32 %v2511, %v397
      %2521 = vmatprep.subr.bf16.mxu0 0
      %2522 = vmatpush1.bf16.msra.mxu0 %v2519
      %2523 = vmatprep.subr.bf16.mxu0 0
      %2524 = vmatpush1.bf16.msra.mxu0 0
      %2525 = vmatprep.subr.bf16.mxu0 0
      %2526 = vmatpush1.bf16.msra.mxu0 0
      %2527 = vmatprep.subr.bf16.mxu0 0
      %2528 = vmatpush1.bf16.msra.mxu0 0
      %2529 = vmatprep.subr.bf16.mxu0 0
      %2530 = vmatpush1.bf16.msra.mxu0 0
      %2531 = vmatprep.subr.bf16.mxu0 0
      %2532 = vmatpush1.bf16.msra.mxu0 0
      %2533 = vmatprep.subr.bf16.mxu0 0
      %2534 = vmatpush1.bf16.msra.mxu0 0
      %2535 = vmatprep.subr.bf16.mxu0 0
      %2536 = vmatpush1.bf16.msra.mxu0 0
      %2537 = vmatprep.subr.bf16.mxu0 0
      %2538 = vmatpush1.bf16.msra.mxu0 0
      %2539 = vmatprep.subr.bf16.mxu0 0
      %2540 = vmatpush1.bf16.msra.mxu0 0
      %2541 = vmatprep.subr.bf16.mxu0 0
      %2542 = vmatpush1.bf16.msra.mxu0 0
      %2543 = vmatprep.subr.bf16.mxu0 0
      %2544 = vmatpush1.bf16.msra.mxu0 0
      %2545 = vmatprep.subr.bf16.mxu0 0
      %2546 = vmatpush1.bf16.msra.mxu0 0
      %2547 = vmatprep.subr.bf16.mxu0 0
      %2548 = vmatpush1.bf16.msra.mxu0 0
      %2549 = vmatprep.subr.bf16.mxu0 0
      %2550 = vmatpush1.bf16.msra.mxu0 0
      %2551 = vmatprep.subr.bf16.mxu0 0
      %2552 = vmatpush1.bf16.msra.mxu0 0
      %2553 = vmatprep.mubr.bf16.mxu0 0
      %2554 = vmatmul.mubr.bf16.gmra.mrb[0].mxu0 %v2262
      %v2555 = vpop.f32.mrb[0].mxu0
      %v2556 = vadd.f32 0.0, %v2555
      %v2557 = vpop.f32.mrb[0].mxu0
      %v2558 = vpop.f32.mrb[0].mxu0
      %v2559 = vadd.f32 0.0, %v2558
      %v2560 = vpop.f32.mrb[0].mxu0
      %2561 = vmatprep.mubr.bf16.mxu0 0
      %2562 = vmatmul.mubr.bf16.gmra.mrb[0].mxu0 %v2265
      %v2563 = vpop.f32.mrb[0].mxu0
      %v2564 = vadd.f32 0.0, %v2563
      %v2565 = vpop.f32.mrb[0].mxu0
      %v2566 = vpop.f32.mrb[0].mxu0
      %v2567 = vadd.f32 0.0, %v2566
      %v2568 = vpop.f32.mrb[0].mxu0
      %2569 = vmatprep.mubr.bf16.mxu0 0
      %2570 = vmatmul.mubr.bf16.gmra.mrb[0].mxu0 %v2268
      %v2571 = vpop.f32.mrb[0].mxu0
      %v2572 = vadd.f32 0.0, %v2571
      %v2573 = vpop.f32.mrb[0].mxu0
      %v2574 = vpop.f32.mrb[0].mxu0
      %v2575 = vadd.f32 0.0, %v2574
      %v2576 = vpop.f32.mrb[0].mxu0
      %2577 = vmatprep.mubr.bf16.mxu0 0
      %2578 = vmatmul.mubr.bf16.gmra.mrb[0].mxu0 %v2271
      %v2579 = vpop.f32.mrb[0].mxu0
      %v2580 = vadd.f32 0.0, %v2579
      %v2581 = vpop.f32.mrb[0].mxu0
      %v2582 = vpop.f32.mrb[0].mxu0
      %v2583 = vadd.f32 0.0, %v2582
      %v2584 = vpop.f32.mrb[0].mxu0
      %2585 = vmatprep.mubr.bf16.mxu0 0
      %2586 = vmatmul.mubr.bf16.gmra.mrb[0].mxu0 %v2274
      %v2587 = vpop.f32.mrb[0].mxu0
      %v2588 = vadd.f32 0.0, %v2587
      %v2589 = vpop.f32.mrb[0].mxu0
      %v2590 = vpop.f32.mrb[0].mxu0
      %v2591 = vadd.f32 0.0, %v2590
      %v2592 = vpop.f32.mrb[0].mxu0
      %2593 = vmatprep.mubr.bf16.mxu0 0
      %2594 = vmatmul.mubr.bf16.gmra.mrb[0].mxu0 %v2277
      %v2595 = vpop.f32.mrb[0].mxu0
      %v2596 = vadd.f32 0.0, %v2595
      %v2597 = vpop.f32.mrb[0].mxu0
      %v2598 = vpop.f32.mrb[0].mxu0
      %v2599 = vadd.f32 0.0, %v2598
      %v2600 = vpop.f32.mrb[0].mxu0
      %2601 = vmatprep.mubr.bf16.mxu0 0
      %2602 = vmatmul.mubr.bf16.gmra.mrb[0].mxu0 %v2280
      %v2603 = vpop.f32.mrb[0].mxu0
      %v2604 = vadd.f32 0.0, %v2603
      %v2605 = vpop.f32.mrb[0].mxu0
      %v2606 = vpop.f32.mrb[0].mxu0
      %v2607 = vadd.f32 0.0, %v2606
      %v2608 = vpop.f32.mrb[0].mxu0
      %2609 = vmatprep.mubr.bf16.mxu0 0
      %2610 = vmatmul.mubr.bf16.gmra.mrb[0].mxu0 %v2283
      %v2611 = vpop.f32.mrb[0].mxu0
      %v2612 = vadd.f32 0.0, %v2611
      %v2613 = vpop.f32.mrb[0].mxu0
      %v2614 = vpop.f32.mrb[0].mxu0
      %v2615 = vadd.f32 0.0, %v2614
      %v2616 = vpop.f32.mrb[0].mxu0
      %2617 = vmatprep.mubr.bf16.mxu0 0
      %2618 = vmatmul.mubr.bf16.gmra.mrb[0].mxu0 %v2286
      %v2619 = vpop.f32.mrb[0].mxu0
      %v2620 = vadd.f32 0.0, %v2619
      %v2621 = vpop.f32.mrb[0].mxu0
      %v2622 = vpop.f32.mrb[0].mxu0
      %v2623 = vadd.f32 0.0, %v2622
      %v2624 = vpop.f32.mrb[0].mxu0
      %2625 = vmatprep.mubr.bf16.mxu0 0
      %2626 = vmatmul.mubr.bf16.gmra.mrb[0].mxu0 %v2289
      %v2627 = vpop.f32.mrb[0].mxu0
      %v2628 = vadd.f32 0.0, %v2627
      %v2629 = vpop.f32.mrb[0].mxu0
      %v2630 = vpop.f32.mrb[0].mxu0
      %v2631 = vadd.f32 0.0, %v2630
      %v2632 = vpop.f32.mrb[0].mxu0
      %2633 = vmatprep.mubr.bf16.mxu0 0
      %2634 = vmatmul.mubr.bf16.gmra.mrb[0].mxu0 %v2292
      %v2635 = vpop.f32.mrb[0].mxu0
      %v2636 = vadd.f32 0.0, %v2635
      %v2637 = vpop.f32.mrb[0].mxu0
      %v2638 = vpop.f32.mrb[0].mxu0
      %v2639 = vadd.f32 0.0, %v2638
      %v2640 = vpop.f32.mrb[0].mxu0
      %2641 = vmatprep.mubr.bf16.mxu0 0
      %2642 = vmatmul.mubr.bf16.gmra.mrb[0].mxu0 %v2295
      %v2643 = vpop.f32.mrb[0].mxu0
      %v2644 = vadd.f32 0.0, %v2643
      %v2645 = vpop.f32.mrb[0].mxu0
      %v2646 = vpop.f32.mrb[0].mxu0
      %v2647 = vadd.f32 0.0, %v2646
      %v2648 = vpop.f32.mrb[0].mxu0
      %2649 = vmatprep.mubr.bf16.mxu0 0
      %2650 = vmatmul.mubr.bf16.gmra.mrb[0].mxu0 %v2298
      %v2651 = vpop.f32.mrb[0].mxu0
      %v2652 = vadd.f32 0.0, %v2651
      %v2653 = vpop.f32.mrb[0].mxu0
      %v2654 = vpop.f32.mrb[0].mxu0
      %v2655 = vadd.f32 0.0, %v2654
      %v2656 = vpop.f32.mrb[0].mxu0
      %2657 = vmatprep.mubr.bf16.mxu0 0
      %2658 = vmatmul.mubr.bf16.gmra.mrb[0].mxu0 %v2301
      %v2659 = vpop.f32.mrb[0].mxu0
      %v2660 = vadd.f32 0.0, %v2659
      %v2661 = vpop.f32.mrb[0].mxu0
      %v2662 = vpop.f32.mrb[0].mxu0
      %v2663 = vadd.f32 0.0, %v2662
      %v2664 = vpop.f32.mrb[0].mxu0
      %2665 = vmatprep.mubr.bf16.mxu0 0
      %2666 = vmatmul.mubr.bf16.gmra.mrb[0].mxu0 %v2304
      %v2667 = vpop.f32.mrb[0].mxu0
      %v2668 = vadd.f32 0.0, %v2667
      %v2669 = vpop.f32.mrb[0].mxu0
      %v2670 = vpop.f32.mrb[0].mxu0
      %v2671 = vadd.f32 0.0, %v2670
      %v2672 = vpop.f32.mrb[0].mxu0
      %2673 = vmatprep.mubr.bf16.mxu0 0
      %2674 = vmatmul.mubr.bf16.gmra.mrb[0].mxu0 %v2516
      %v2675 = vpop.f32.mrb[0].mxu0
      %v2676 = vadd.f32 0.0, %v2675
      %v2677 = vpop.f32.mrb[0].mxu0
      %v2678 = vpop.f32.mrb[0].mxu0
      %v2679 = vadd.f32 0.0, %v2678
      %v2680 = vpop.f32.mrb[0].mxu0
      %2681 = vdwg.mxu0
      %v2682 = vadd.f32 %v2470, %v2556
      %v2683 = vadd.f32 %v2471, %v2559
      %v2684 = vadd.f32 %v2472, %v2564
      %v2685 = vadd.f32 %v2473, %v2567
      %v2686 = vadd.f32 %v2474, %v2572
      %v2687 = vadd.f32 %v2475, %v2575
      %v2688 = vadd.f32 %v2476, %v2580
      %v2689 = vadd.f32 %v2477, %v2583
      %v2690 = vadd.f32 %v2478, %v2588
      %v2691 = vadd.f32 %v2479, %v2591
      %v2692 = vadd.f32 %v2480, %v2596
      %v2693 = vadd.f32 %v2481, %v2599
      %v2694 = vadd.f32 %v2482, %v2604
      %v2695 = vadd.f32 %v2483, %v2607
      %v2696 = vadd.f32 %v2484, %v2612
      %v2697 = vadd.f32 %v2485, %v2615
      %v2698 = vadd.f32 %v2486, %v2620
      %v2699 = vadd.f32 %v2487, %v2623
      %v2700 = vadd.f32 %v2488, %v2628
      %v2701 = vadd.f32 %v2489, %v2631
      %v2702 = vadd.f32 %v2490, %v2636
      %v2703 = vadd.f32 %v2491, %v2639
      %v2704 = vadd.f32 %v2492, %v2644
      %v2705 = vadd.f32 %v2493, %v2647
      %v2706 = vadd.f32 %v2494, %v2652
      %v2707 = vadd.f32 %v2495, %v2655
      %v2708 = vadd.f32 %v2496, %v2660
      %v2709 = vadd.f32 %v2497, %v2663
      %v2710 = vadd.f32 %v2498, %v2668
      %v2711 = vadd.f32 %v2499, %v2671
      %v2712 = vadd.f32 %v2500, %v2676
      %v2713 = vadd.f32 %v2501, %v2679
      %v2715 = vrot.slane %v259, 5
      %v2716 = vrot.slane %v2715, 4
      %v2717 = vrot.slane %v260, 5
      %v2718 = vsel %vm2095, %v2716, %v2717
      %v2719 = vrot.slane %v2717, 4
      %v2720 = vrot.slane %v261, 5
      %v2721 = vsel %vm2095, %v2719, %v2720
      %s2722 = scalar_lea.vmem %s1, 16
      %v2723 = vld [vmem:[%s2722] sm:$0x3]
      %v2724 = vunpack.c.l.b16 %v2718
      %v2725 = vunpack.c.l.b16 %v2721
      %v2726 = vpack.c.b16 %v2725, %v2724
      %v2728 = vsel %vm345, %v2726, 0
      %v2731 = vand.u32 %v2723, %v397
      %2733 = vmatprep.subr.bf16.mxu0 0
      %2734 = vmatpush1.bf16.msra.mxu0 %v2731
      %2735 = vmatprep.subr.bf16.mxu0 0
      %2736 = vmatpush1.bf16.msra.mxu0 0
      %2737 = vmatprep.subr.bf16.mxu0 0
      %2738 = vmatpush1.bf16.msra.mxu0 0
      %2739 = vmatprep.subr.bf16.mxu0 0
      %2740 = vmatpush1.bf16.msra.mxu0 0
      %2741 = vmatprep.subr.bf16.mxu0 0
      %2742 = vmatpush1.bf16.msra.mxu0 0
      %2743 = vmatprep.subr.bf16.mxu0 0
      %2744 = vmatpush1.bf16.msra.mxu0 0
      %2745 = vmatprep.subr.bf16.mxu0 0
      %2746 = vmatpush1.bf16.msra.mxu0 0
      %2747 = vmatprep.subr.bf16.mxu0 0
      %2748 = vmatpush1.bf16.msra.mxu0 0
      %2749 = vmatprep.subr.bf16.mxu0 0
      %2750 = vmatpush1.bf16.msra.mxu0 0
      %2751 = vmatprep.subr.bf16.mxu0 0
      %2752 = vmatpush1.bf16.msra.mxu0 0
      %2753 = vmatprep.subr.bf16.mxu0 0
      %2754 = vmatpush1.bf16.msra.mxu0 0
      %2755 = vmatprep.subr.bf16.mxu0 0
      %2756 = vmatpush1.bf16.msra.mxu0 0
      %2757 = vmatprep.subr.bf16.mxu0 0
      %2758 = vmatpush1.bf16.msra.mxu0 0
      %2759 = vmatprep.subr.bf16.mxu0 0
      %2760 = vmatpush1.bf16.msra.mxu0 0
      %2761 = vmatprep.subr.bf16.mxu0 0
      %2762 = vmatpush1.bf16.msra.mxu0 0
      %2763 = vmatprep.subr.bf16.mxu0 0
      %2764 = vmatpush1.bf16.msra.mxu0 0
      %2765 = vmatprep.mubr.bf16.mxu0 0
      %2766 = vmatmul.mubr.bf16.gmra.mrb[0].mxu0 %v2265
      %v2767 = vpop.f32.mrb[0].mxu0
      %v2768 = vadd.f32 0.0, %v2767
      %v2769 = vpop.f32.mrb[0].mxu0
      %v2770 = vpop.f32.mrb[0].mxu0
      %v2771 = vadd.f32 0.0, %v2770
      %v2772 = vpop.f32.mrb[0].mxu0
      %2773 = vmatprep.mubr.bf16.mxu0 0
      %2774 = vmatmul.mubr.bf16.gmra.mrb[0].mxu0 %v2268
      %v2775 = vpop.f32.mrb[0].mxu0
      %v2776 = vadd.f32 0.0, %v2775
      %v2777 = vpop.f32.mrb[0].mxu0
      %v2778 = vpop.f32.mrb[0].mxu0
      %v2779 = vadd.f32 0.0, %v2778
      %v2780 = vpop.f32.mrb[0].mxu0
      %2781 = vmatprep.mubr.bf16.mxu0 0
      %2782 = vmatmul.mubr.bf16.gmra.mrb[0].mxu0 %v2271
      %v2783 = vpop.f32.mrb[0].mxu0
      %v2784 = vadd.f32 0.0, %v2783
      %v2785 = vpop.f32.mrb[0].mxu0
      %v2786 = vpop.f32.mrb[0].mxu0
      %v2787 = vadd.f32 0.0, %v2786
      %v2788 = vpop.f32.mrb[0].mxu0
      %2789 = vmatprep.mubr.bf16.mxu0 0
      %2790 = vmatmul.mubr.bf16.gmra.mrb[0].mxu0 %v2274
      %v2791 = vpop.f32.mrb[0].mxu0
      %v2792 = vadd.f32 0.0, %v2791
      %v2793 = vpop.f32.mrb[0].mxu0
      %v2794 = vpop.f32.mrb[0].mxu0
      %v2795 = vadd.f32 0.0, %v2794
      %v2796 = vpop.f32.mrb[0].mxu0
      %2797 = vmatprep.mubr.bf16.mxu0 0
      %2798 = vmatmul.mubr.bf16.gmra.mrb[0].mxu0 %v2277
      %v2799 = vpop.f32.mrb[0].mxu0
      %v2800 = vadd.f32 0.0, %v2799
      %v2801 = vpop.f32.mrb[0].mxu0
      %v2802 = vpop.f32.mrb[0].mxu0
      %v2803 = vadd.f32 0.0, %v2802
      %v2804 = vpop.f32.mrb[0].mxu0
      %2805 = vmatprep.mubr.bf16.mxu0 0
      %2806 = vmatmul.mubr.bf16.gmra.mrb[0].mxu0 %v2280
      %v2807 = vpop.f32.mrb[0].mxu0
      %v2808 = vadd.f32 0.0, %v2807
      %v2809 = vpop.f32.mrb[0].mxu0
      %v2810 = vpop.f32.mrb[0].mxu0
      %v2811 = vadd.f32 0.0, %v2810
      %v2812 = vpop.f32.mrb[0].mxu0
      %2813 = vmatprep.mubr.bf16.mxu0 0
      %2814 = vmatmul.mubr.bf16.gmra.mrb[0].mxu0 %v2283
      %v2815 = vpop.f32.mrb[0].mxu0
      %v2816 = vadd.f32 0.0, %v2815
      %v2817 = vpop.f32.mrb[0].mxu0
      %v2818 = vpop.f32.mrb[0].mxu0
      %v2819 = vadd.f32 0.0, %v2818
      %v2820 = vpop.f32.mrb[0].mxu0
      %2821 = vmatprep.mubr.bf16.mxu0 0
      %2822 = vmatmul.mubr.bf16.gmra.mrb[0].mxu0 %v2286
      %v2823 = vpop.f32.mrb[0].mxu0
      %v2824 = vadd.f32 0.0, %v2823
      %v2825 = vpop.f32.mrb[0].mxu0
      %v2826 = vpop.f32.mrb[0].mxu0
      %v2827 = vadd.f32 0.0, %v2826
      %v2828 = vpop.f32.mrb[0].mxu0
      %2829 = vmatprep.mubr.bf16.mxu0 0
      %2830 = vmatmul.mubr.bf16.gmra.mrb[0].mxu0 %v2289
      %v2831 = vpop.f32.mrb[0].mxu0
      %v2832 = vadd.f32 0.0, %v2831
      %v2833 = vpop.f32.mrb[0].mxu0
      %v2834 = vpop.f32.mrb[0].mxu0
      %v2835 = vadd.f32 0.0, %v2834
      %v2836 = vpop.f32.mrb[0].mxu0
      %2837 = vmatprep.mubr.bf16.mxu0 0
      %2838 = vmatmul.mubr.bf16.gmra.mrb[0].mxu0 %v2292
      %v2839 = vpop.f32.mrb[0].mxu0
      %v2840 = vadd.f32 0.0, %v2839
      %v2841 = vpop.f32.mrb[0].mxu0
      %v2842 = vpop.f32.mrb[0].mxu0
      %v2843 = vadd.f32 0.0, %v2842
      %v2844 = vpop.f32.mrb[0].mxu0
      %2845 = vmatprep.mubr.bf16.mxu0 0
      %2846 = vmatmul.mubr.bf16.gmra.mrb[0].mxu0 %v2295
      %v2847 = vpop.f32.mrb[0].mxu0
      %v2848 = vadd.f32 0.0, %v2847
      %v2849 = vpop.f32.mrb[0].mxu0
      %v2850 = vpop.f32.mrb[0].mxu0
      %v2851 = vadd.f32 0.0, %v2850
      %v2852 = vpop.f32.mrb[0].mxu0
      %2853 = vmatprep.mubr.bf16.mxu0 0
      %2854 = vmatmul.mubr.bf16.gmra.mrb[0].mxu0 %v2298
      %v2855 = vpop.f32.mrb[0].mxu0
      %v2856 = vadd.f32 0.0, %v2855
      %v2857 = vpop.f32.mrb[0].mxu0
      %v2858 = vpop.f32.mrb[0].mxu0
      %v2859 = vadd.f32 0.0, %v2858
      %v2860 = vpop.f32.mrb[0].mxu0
      %2861 = vmatprep.mubr.bf16.mxu0 0
      %2862 = vmatmul.mubr.bf16.gmra.mrb[0].mxu0 %v2301
      %v2863 = vpop.f32.mrb[0].mxu0
      %v2864 = vadd.f32 0.0, %v2863
      %v2865 = vpop.f32.mrb[0].mxu0
      %v2866 = vpop.f32.mrb[0].mxu0
      %v2867 = vadd.f32 0.0, %v2866
      %v2868 = vpop.f32.mrb[0].mxu0
      %2869 = vmatprep.mubr.bf16.mxu0 0
      %2870 = vmatmul.mubr.bf16.gmra.mrb[0].mxu0 %v2304
      %v2871 = vpop.f32.mrb[0].mxu0
      %v2872 = vadd.f32 0.0, %v2871
      %v2873 = vpop.f32.mrb[0].mxu0
      %v2874 = vpop.f32.mrb[0].mxu0
      %v2875 = vadd.f32 0.0, %v2874
      %v2876 = vpop.f32.mrb[0].mxu0
      %2877 = vmatprep.mubr.bf16.mxu0 0
      %2878 = vmatmul.mubr.bf16.gmra.mrb[0].mxu0 %v2516
      %v2879 = vpop.f32.mrb[0].mxu0
      %v2880 = vadd.f32 0.0, %v2879
      %v2881 = vpop.f32.mrb[0].mxu0
      %v2882 = vpop.f32.mrb[0].mxu0
      %v2883 = vadd.f32 0.0, %v2882
      %v2884 = vpop.f32.mrb[0].mxu0
      %2885 = vmatprep.mubr.bf16.mxu0 0
      %2886 = vmatmul.mubr.bf16.gmra.mrb[0].mxu0 %v2728
      %v2887 = vpop.f32.mrb[0].mxu0
      %v2888 = vadd.f32 0.0, %v2887
      %v2889 = vpop.f32.mrb[0].mxu0
      %v2890 = vpop.f32.mrb[0].mxu0
      %v2891 = vadd.f32 0.0, %v2890
      %v2892 = vpop.f32.mrb[0].mxu0
      %2893 = vdwg.mxu0
      %v2894 = vadd.f32 %v2682, %v2768
      %v2895 = vadd.f32 %v2683, %v2771
      %v2896 = vadd.f32 %v2684, %v2776
      %v2897 = vadd.f32 %v2685, %v2779
      %v2898 = vadd.f32 %v2686, %v2784
      %v2899 = vadd.f32 %v2687, %v2787
      %v2900 = vadd.f32 %v2688, %v2792
      %v2901 = vadd.f32 %v2689, %v2795
      %v2902 = vadd.f32 %v2690, %v2800
      %v2903 = vadd.f32 %v2691, %v2803
      %v2904 = vadd.f32 %v2692, %v2808
      %v2905 = vadd.f32 %v2693, %v2811
      %v2906 = vadd.f32 %v2694, %v2816
      %v2907 = vadd.f32 %v2695, %v2819
      %v2908 = vadd.f32 %v2696, %v2824
      %v2909 = vadd.f32 %v2697, %v2827
      %v2910 = vadd.f32 %v2698, %v2832
      %v2911 = vadd.f32 %v2699, %v2835
      %v2912 = vadd.f32 %v2700, %v2840
      %v2913 = vadd.f32 %v2701, %v2843
      %v2914 = vadd.f32 %v2702, %v2848
      %v2915 = vadd.f32 %v2703, %v2851
      %v2916 = vadd.f32 %v2704, %v2856
      %v2917 = vadd.f32 %v2705, %v2859
      %v2918 = vadd.f32 %v2706, %v2864
      %v2919 = vadd.f32 %v2707, %v2867
      %v2920 = vadd.f32 %v2708, %v2872
      %v2921 = vadd.f32 %v2709, %v2875
      %v2922 = vadd.f32 %v2710, %v2880
      %v2923 = vadd.f32 %v2711, %v2883
      %v2924 = vadd.f32 %v2712, %v2888
      %v2925 = vadd.f32 %v2713, %v2891
      %v2926 = vld [vmem:[%s2] sm:$0x1]
      %v2928 = vlaneseq
      %v2929 = vshrl.u32 %v2928, 7
      %v2930 = vsub.s32 0, %v2929
      %v2931 = vrot.slane %v2926, %v2930
      %v2933 = vadd.f32 %v2894, %v2931
      %v2934 = vadd.f32 %v2895, %v2931
      %v2935 = vadd.f32 %v2896, %v2931
      %v2936 = vadd.f32 %v2897, %v2931
      %v2937 = vadd.f32 %v2898, %v2931
      %v2938 = vadd.f32 %v2899, %v2931
      %v2939 = vadd.f32 %v2900, %v2931
      %v2940 = vadd.f32 %v2901, %v2931
      %v2941 = vadd.f32 %v2902, %v2931
      %v2942 = vadd.f32 %v2903, %v2931
      %v2943 = vadd.f32 %v2904, %v2931
      %v2944 = vadd.f32 %v2905, %v2931
      %v2945 = vadd.f32 %v2906, %v2931
      %v2946 = vadd.f32 %v2907, %v2931
      %v2947 = vadd.f32 %v2908, %v2931
      %v2948 = vadd.f32 %v2909, %v2931
      %v2949 = vadd.f32 %v2910, %v2931
      %v2950 = vadd.f32 %v2911, %v2931
      %v2951 = vadd.f32 %v2912, %v2931
      %v2952 = vadd.f32 %v2913, %v2931
      %v2953 = vadd.f32 %v2914, %v2931
      %v2954 = vadd.f32 %v2915, %v2931
      %v2955 = vadd.f32 %v2916, %v2931
      %v2956 = vadd.f32 %v2917, %v2931
      %v2957 = vadd.f32 %v2918, %v2931
      %v2958 = vadd.f32 %v2919, %v2931
      %v2959 = vadd.f32 %v2920, %v2931
      %v2960 = vadd.f32 %v2921, %v2931
      %v2961 = vadd.f32 %v2922, %v2931
      %v2962 = vadd.f32 %v2923, %v2931
      %v2963 = vadd.f32 %v2924, %v2931
      %v2964 = vadd.f32 %v2925, %v2931
      %v2965 = vmax.f32 %v2933, 0.0
      %v2966 = vmax.f32 %v2934, 0.0
      %v2967 = vmax.f32 %v2935, 0.0
      %v2968 = vmax.f32 %v2936, 0.0
      %v2969 = vmax.f32 %v2937, 0.0
      %v2970 = vmax.f32 %v2938, 0.0
      %v2971 = vmax.f32 %v2939, 0.0
      %v2972 = vmax.f32 %v2940, 0.0
      %v2973 = vmax.f32 %v2941, 0.0
      %v2974 = vmax.f32 %v2942, 0.0
      %v2975 = vmax.f32 %v2943, 0.0
      %v2976 = vmax.f32 %v2944, 0.0
      %v2977 = vmax.f32 %v2945, 0.0
      %v2978 = vmax.f32 %v2946, 0.0
      %v2979 = vmax.f32 %v2947, 0.0
      %v2980 = vmax.f32 %v2948, 0.0
      %v2981 = vmax.f32 %v2949, 0.0
      %v2982 = vmax.f32 %v2950, 0.0
      %v2983 = vmax.f32 %v2951, 0.0
      %v2984 = vmax.f32 %v2952, 0.0
      %v2985 = vmax.f32 %v2953, 0.0
      %v2986 = vmax.f32 %v2954, 0.0
      %v2987 = vmax.f32 %v2955, 0.0
      %v2988 = vmax.f32 %v2956, 0.0
      %v2989 = vmax.f32 %v2957, 0.0
      %v2990 = vmax.f32 %v2958, 0.0
      %v2991 = vmax.f32 %v2959, 0.0
      %v2992 = vmax.f32 %v2960, 0.0
      %v2993 = vmax.f32 %v2961, 0.0
      %v2994 = vmax.f32 %v2962, 0.0
      %v2995 = vmax.f32 %v2963, 0.0
      %v2996 = vmax.f32 %v2964, 0.0
      %v2997 = vpack.c.bf16 %v2966, %v2965
      %v2998 = vpack.c.bf16 %v2968, %v2967
      %v2999 = vpack.c.bf16 %v2970, %v2969
      %v3000 = vpack.c.bf16 %v2972, %v2971
      %v3001 = vpack.c.bf16 %v2974, %v2973
      %v3002 = vpack.c.bf16 %v2976, %v2975
      %v3003 = vpack.c.bf16 %v2978, %v2977
      %v3004 = vpack.c.bf16 %v2980, %v2979
      %v3005 = vpack.c.bf16 %v2982, %v2981
      %v3006 = vpack.c.bf16 %v2984, %v2983
      %v3007 = vpack.c.bf16 %v2986, %v2985
      %v3008 = vpack.c.bf16 %v2988, %v2987
      %v3009 = vpack.c.bf16 %v2990, %v2989
      %v3010 = vpack.c.bf16 %v2992, %v2991
      %v3011 = vpack.c.bf16 %v2994, %v2993
      %v3012 = vpack.c.bf16 %v2996, %v2995
      %v3029 = vunpack.c.l.b16 %v2997
      %v3030 = vunpack.c.h.b16 %v2997
      %v3031 = vunpack.c.l.b16 %v2998
      %v3032 = vunpack.c.h.b16 %v2998
      %v3033 = vunpack.c.l.b16 %v2999
      %v3034 = vunpack.c.h.b16 %v2999
      %v3035 = vunpack.c.l.b16 %v3000
      %v3036 = vunpack.c.h.b16 %v3000
      %v3037 = vunpack.c.l.b16 %v3001
      %v3038 = vunpack.c.h.b16 %v3001
      %v3039 = vunpack.c.l.b16 %v3002
      %v3040 = vunpack.c.h.b16 %v3002
      %v3041 = vunpack.c.l.b16 %v3003
      %v3042 = vunpack.c.h.b16 %v3003
      %v3043 = vunpack.c.l.b16 %v3004
      %v3044 = vunpack.c.h.b16 %v3004
      %v3045 = vunpack.c.l.b16 %v3005
      %v3046 = vunpack.c.h.b16 %v3005
      %v3047 = vunpack.c.l.b16 %v3006
      %v3048 = vunpack.c.h.b16 %v3006
      %v3049 = vunpack.c.l.b16 %v3007
      %v3050 = vunpack.c.h.b16 %v3007
      %v3051 = vunpack.c.l.b16 %v3008
      %v3052 = vunpack.c.h.b16 %v3008
      %v3053 = vunpack.c.l.b16 %v3009
      %v3054 = vunpack.c.h.b16 %v3009
      %v3055 = vunpack.c.l.b16 %v3010
      %v3056 = vunpack.c.h.b16 %v3010
      %v3057 = vunpack.c.l.b16 %v3011
      %v3058 = vunpack.c.h.b16 %v3011
      %v3059 = vunpack.c.l.b16 %v3012
      %v3060 = vunpack.c.h.b16 %v3012
      %v3061 = vpack.c.b16 %v3029, %v3029
      %v3062 = vpack.c.b16 %v3030, %v3030
      %v3063 = vpack.c.b16 %v3031, %v3031
      %v3064 = vpack.c.b16 %v3032, %v3032
      %v3065 = vpack.c.b16 %v3033, %v3033
      %v3066 = vpack.c.b16 %v3034, %v3034
      %v3067 = vpack.c.b16 %v3035, %v3035
      %v3068 = vpack.c.b16 %v3036, %v3036
      %v3069 = vpack.c.b16 %v3037, %v3037
      %v3070 = vpack.c.b16 %v3038, %v3038
      %v3071 = vpack.c.b16 %v3039, %v3039
      %v3072 = vpack.c.b16 %v3040, %v3040
      %v3073 = vpack.c.b16 %v3041, %v3041
      %v3074 = vpack.c.b16 %v3042, %v3042
      %v3075 = vpack.c.b16 %v3043, %v3043
      %v3076 = vpack.c.b16 %v3044, %v3044
      %v3077 = vpack.c.b16 %v3045, %v3045
      %v3078 = vpack.c.b16 %v3046, %v3046
      %v3079 = vpack.c.b16 %v3047, %v3047
      %v3080 = vpack.c.b16 %v3048, %v3048
      %v3081 = vpack.c.b16 %v3049, %v3049
      %v3082 = vpack.c.b16 %v3050, %v3050
      %v3083 = vpack.c.b16 %v3051, %v3051
      %v3084 = vpack.c.b16 %v3052, %v3052
      %v3085 = vpack.c.b16 %v3053, %v3053
      %v3086 = vpack.c.b16 %v3054, %v3054
      %v3087 = vpack.c.b16 %v3055, %v3055
      %v3088 = vpack.c.b16 %v3056, %v3056
      %v3089 = vpack.c.b16 %v3057, %v3057
      %v3090 = vpack.c.b16 %v3058, %v3058
      %v3091 = vpack.c.b16 %v3059, %v3059
      %v3092 = vpack.c.b16 %v3060, %v3060
      %vm3125 = vcmask 519168
      %3126 = vst.msk [vmem:[%s206] sm:$0xf] %vm3125, %v3061
      %3127 = vst.msk [vmem:[%s206 + $0x4] sm:$0xf] %vm3125, %v3062
      %3128 = vst.msk [vmem:[%s206 + $0x8] sm:$0xf] %vm3125, %v3063
      %3129 = vst.msk [vmem:[%s206 + $0xc] sm:$0xf] %vm3125, %v3064
      %3130 = vst.msk [vmem:[%s206 + $0x10] sm:$0xf] %vm3125, %v3065
      %3131 = vst.msk [vmem:[%s206 + $0x14] sm:$0xf] %vm3125, %v3066
      %3132 = vst.msk [vmem:[%s206 + $0x18] sm:$0xf] %vm3125, %v3067
      %3133 = vst.msk [vmem:[%s206 + $0x1c] sm:$0xf] %vm3125, %v3068
      %3134 = vst.msk [vmem:[%s206 + $0x20] sm:$0xf] %vm3125, %v3069
      %3135 = vst.msk [vmem:[%s206 + $0x24] sm:$0xf] %vm3125, %v3070
      %3136 = vst.msk [vmem:[%s206 + $0x28] sm:$0xf] %vm3125, %v3071
      %3137 = vst.msk [vmem:[%s206 + $0x2c] sm:$0xf] %vm3125, %v3072
      %3138 = vst.msk [vmem:[%s206 + $0x30] sm:$0xf] %vm3125, %v3073
      %3139 = vst.msk [vmem:[%s206 + $0x34] sm:$0xf] %vm3125, %v3074
      %3140 = vst.msk [vmem:[%s206 + $0x38] sm:$0xf] %vm3125, %v3075
      %3141 = vst.msk [vmem:[%s206 + $0x3c] sm:$0xf] %vm3125, %v3076
      %3142 = vst.msk [vmem:[%s206 + $0x40] sm:$0xf] %vm3125, %v3077
      %3143 = vst.msk [vmem:[%s206 + $0x44] sm:$0xf] %vm3125, %v3078
      %3144 = vst.msk [vmem:[%s206 + $0x48] sm:$0xf] %vm3125, %v3079
      %3145 = vst.msk [vmem:[%s206 + $0x4c] sm:$0xf] %vm3125, %v3080
      %3146 = vst.msk [vmem:[%s206 + $0x50] sm:$0xf] %vm3125, %v3081
      %3147 = vst.msk [vmem:[%s206 + $0x54] sm:$0xf] %vm3125, %v3082
      %3148 = vst.msk [vmem:[%s206 + $0x58] sm:$0xf] %vm3125, %v3083
      %3149 = vst.msk [vmem:[%s206 + $0x5c] sm:$0xf] %vm3125, %v3084
      %3150 = vst.msk [vmem:[%s206 + $0x60] sm:$0xf] %vm3125, %v3085
      %3151 = vst.msk [vmem:[%s206 + $0x64] sm:$0xf] %vm3125, %v3086
      %3152 = vst.msk [vmem:[%s206 + $0x68] sm:$0xf] %vm3125, %v3087
      %3153 = vst.msk [vmem:[%s206 + $0x6c] sm:$0xf] %vm3125, %v3088
      %3154 = vst.msk [vmem:[%s206 + $0x70] sm:$0xf] %vm3125, %v3089
      %3155 = vst.msk [vmem:[%s206 + $0x74] sm:$0xf] %vm3125, %v3090
      %3156 = vst.msk [vmem:[%s206 + $0x78] sm:$0xf] %vm3125, %v3091
      %3157 = vst.msk [vmem:[%s206 + $0x7c] sm:$0xf] %vm3125, %v3092
      %p3158 = scmp.lt.s32.totalorder %s18, 1
      %s3159 = scalar_select %p3158, %s18, 1
      %p3160 = scmp.lt.s32.totalorder %s19, 0
      %s3161 = scalar_select %p3160, %s19, 0
      %s3162 = smul.addr %s3161, 32
      %s3163 = smul.addr %s3159, 32
      %s3164 = sadd.s32 %s3162, %s3163
      %s3165 = smul.addr %s3164, 4
      %s3166 = scalar_lea.vmem %s3, %s3165
      // Predicated region
      $region33: #{tpu_custom_call.1} parent=31 // pred_check
        %p3167 = pneg %p116
      $region34: #{tpu_custom_call.1} parent=31 // pred_check_branch
        %3169 = sbr.rel (%p3167) target = $region36
      $region35: #{tpu_custom_call.1} parent=31 // pred_region
        _
      $region36: #{tpu_custom_call.1} parent=31 // pred_fallthru
        _
    $region32: #{tpu_custom_call.1} parent=5 // pred_fallthru
      _
    %p3170 = scmp.le.s32.totalorder 2, %s9
    // Predicated region
    $region37: #{tpu_custom_call.1} parent=5 // pred_check
      %p3171 = pneg %p3170
    $region38: #{tpu_custom_call.1} parent=5 // pred_check_branch
      %3173 = sbr.rel (%p3171) target = $region40
    $region39: #{tpu_custom_call.1} parent=5 // pred_region
      %s3174 = ssub.s32 %s9, 2
      // Predicated region
      $region41: #{tpu_custom_call.1} parent=39 // pred_check
        %p3175 = pneg %p122
      $region42: #{tpu_custom_call.1} parent=39 // pred_check_branch
        %3177 = sbr.rel (%p3175) target = $region44
      $region43: #{tpu_custom_call.1} parent=39 // pred_region
        %p3178 = scmp.lt.s32.totalorder %s20, 1
        %s3179 = scalar_select %p3178, %s20, 1
        %p3180 = scmp.lt.s32.totalorder %s21, 0
        %s3181 = scalar_select %p3180, %s21, 0
        %s3182 = smul.addr %s3181, 32
        %s3183 = smul.addr %s3179, 32
        %s3184 = sadd.s32 %s3182, %s3183
        %s3185 = smul.addr %s3184, 4
        %s3186 = scalar_lea.vmem %s3, %s3185
      $region44: #{tpu_custom_call.1} parent=39 // pred_fallthru
        _
    $region40: #{tpu_custom_call.1} parent=5 // pred_fallthru
      _
  $region6: #{tpu_custom_call.1} parent=0 // loop_footer
    %s13 = sadd.s32 1, %s9
  $region7: #{tpu_custom_call.1} parent=0 // loop_footer_branch
    %8 = sbr.rel target = $region3
  $region8: #{tpu_custom_call.1} parent=0 // loop_exit
    _

</llo_original>
